<compile_context>
chip_gen: v5e
topology: v5e:2x2
jax: 0.10.0
libtpu: 0.0.40
codegen_flags: <defaults>
</compile_context>

<pallas_src>
import math
import functools

import jax
import jax.numpy as jnp
from jax import lax
from jax.experimental import pallas as pl
from jax.experimental.pallas import tpu as pltpu


# ---------------------------------------------------------------------------
# Hardware-derived defaults
# ---------------------------------------------------------------------------
_VMEM_CAP = None


def _vmem_cap():
    """Physical VMEM capacity per TensorCore (bytes); conservative fallback = 64 MiB."""
    global _VMEM_CAP
    if _VMEM_CAP is None:
        cap = None
        try:
            info = pltpu.get_tpu_info()
            for name in ("vmem_capacity_bytes", "vmem_size_bytes", "vmem_bytes"):
                cap = getattr(info, name, None)
                if cap:
                    break
        except Exception:
            cap = None
        _VMEM_CAP = int(cap) if cap else 64 * 1024 * 1024
    return _VMEM_CAP


def _vmem_limit_bytes():
    # Leave headroom for Mosaic internal scratch / double buffers:
    # ~48 MiB on v7x (64 MiB parts), ~96 MiB on v5e/v6e (128 MiB parts).
    return (_vmem_cap() * 3) // 4


_SINGLE_BUFFER_OK = None


def _single_buffer_ok():
    """Probe once whether pipeline_mode=pl.Buffered(1) is supported by this Pallas build."""
    global _SINGLE_BUFFER_OK
    if _SINGLE_BUFFER_OK is not None:
        return _SINGLE_BUFFER_OK

    def _copy_kernel(x_ref, o_ref):
        o_ref[...] = x_ref[...] + 1.0

    try:
        spec = pl.BlockSpec((8, 128), lambda i: (0, 0), pipeline_mode=pl.Buffered(1))
        out = pl.pallas_call(
            _copy_kernel,
            out_shape=jax.ShapeDtypeStruct((16, 128), jnp.float32),
            grid=(2,),
            in_specs=[spec],
            out_specs=pl.BlockSpec((8, 128), lambda i: (i, 0)),
        )(jnp.zeros((8, 128), jnp.float32))
        jax.block_until_ready(out)
        _SINGLE_BUFFER_OK = True
    except Exception:
        _SINGLE_BUFFER_OK = False
    return _SINGLE_BUFFER_OK


def _const_spec(shape, arity):
    """BlockSpec for a grid-invariant (VMEM-resident) operand; single-buffered if possible."""
    ndim = len(shape)
    if arity == 2:
        idx = lambda i, j: (0,) * ndim
    elif arity == 3:
        idx = lambda i, j, k: (0,) * ndim
    else:
        raise ValueError(arity)
    if _single_buffer_ok():
        return pl.BlockSpec(shape, idx, pipeline_mode=pl.Buffered(1))
    return pl.BlockSpec(shape, idx)


def _pick_tile(dim, preferred, align):
    """Largest tile <= preferred that divides dim and is a multiple of align, else full dim."""
    if dim <= preferred:
        return dim
    t = preferred - (preferred % align)
    while t >= align:
        if dim % t == 0:
            return t
        t -= align
    return dim


# ---------------------------------------------------------------------------
# Encoder block kernel: one grid point = (batch element b, query tile qi).
# ---------------------------------------------------------------------------
def encoder_block_kernel(vl_ref,                      # scalar-prefetch: (B,) int32 in SMEM
                         x_ref,                       # (1, T, H) bf16, full sequence of batch b
                         wq_ref, bq_ref, wk_ref, bk_ref, wv_ref, bv_ref,
                         wo_ref, bo_ref,
                         g1_ref, be1_ref,
                         w1_ref, b1_ref, w2_ref, b2_ref,
                         g2_ref, be2_ref,
                         o_ref,                       # (1, tq, H) bf16
                         kh_ref, vh_ref,              # scratch: (nh, T, hd) bf16 each
                         *, num_heads, tq):
    b = pl.program_id(0)
    qi = pl.program_id(1)

    T = x_ref.shape[1]
    H = x_ref.shape[2]
    hd = H // num_heads

    def linear(a_bf16, w_ref, b_ref):
        # bf16 x bf16 on the MXU, f32 accumulation, f32 bias add (bias is (1, out)).
        y = jnp.dot(a_bf16, w_ref[...], preferred_element_type=jnp.float32)
        return y + b_ref[...]

    # ---- K/V projection + head split: once per batch element, carried across qi ----
    @pl.when(qi == 0)
    def _():
        x_kv = x_ref[0]                                        # (T, H) bf16
        k = linear(x_kv, wk_ref, bk_ref)                       # (T, H) f32
        v = linear(x_kv, wv_ref, bv_ref)
        kh_ref[...] = jnp.transpose(
            k.astype(jnp.bfloat16).reshape(T, num_heads, hd), (1, 0, 2))
        vh_ref[...] = jnp.transpose(
            v.astype(jnp.bfloat16).reshape(T, num_heads, hd), (1, 0, 2))

    q_start = pl.multiple_of(qi * tq, tq)
    x_q = x_ref[0, pl.ds(q_start, tq), :]                      # (tq, H) bf16 query rows

    # W_q / b_q are pre-scaled by 1/sqrt(hd) on the host (fold_attention_scale).
    q = linear(x_q, wq_ref, bq_ref)                            # (tq, H) f32
    qh = jnp.transpose(q.astype(jnp.bfloat16).reshape(tq, num_heads, hd), (1, 0, 2))

    scores = jnp.einsum('hqd,hkd->hqk', qh, kh_ref[...],
                        preferred_element_type=jnp.float32)    # (nh, tq, T) f32

    # masked softmax: key position >= valid_len[b] -> -1e6 (matches d2l masked_softmax)
    # TODO(synk): only 1-D valid_lens supported; d2l masked_softmax also accepts 2-D.
    vl = vl_ref[b]                                             # scalar int32 from SMEM
    key_ids = lax.broadcasted_iota(jnp.int32, (1, 1, T), 2)
    scores = jnp.where(key_ids < vl, scores, -1000000.0)
    scores = scores - jnp.max(scores, axis=-1, keepdims=True)
    p = jnp.exp(scores)
    p = p * pl.reciprocal(jnp.sum(p, axis=-1, keepdims=True), approx=True)

    attn = jnp.einsum('hqk,hkd->hqd', p.astype(jnp.bfloat16), vh_ref[...],
                      preferred_element_type=jnp.float32)      # (nh, tq, hd) f32
    attn = jnp.transpose(attn.astype(jnp.bfloat16), (1, 0, 2)).reshape(tq, H)
    attn_out = linear(attn, wo_ref, bo_ref)                    # W_o, (tq, H) f32

    def layer_norm(z, g_ref, bt_ref):                          # f32 throughout
        mu = jnp.mean(z, axis=-1, keepdims=True)
        var = jnp.mean(jnp.square(z - mu), axis=-1, keepdims=True)
        return (z - mu) * lax.rsqrt(var + 1e-5) * g_ref[...] + bt_ref[...]

    # AddNorm1 (dropout = identity)
    y = layer_norm(x_q.astype(jnp.float32) + attn_out, g1_ref, be1_ref)

    # PositionWiseFFN: dense2(relu(dense1(y))); hidden cast to bf16 right after ReLU
    h_mid = jnp.maximum(linear(y.astype(jnp.bfloat16), w1_ref, b1_ref), 0.0)
    ffn = linear(h_mid.astype(jnp.bfloat16), w2_ref, b2_ref)

    # AddNorm2
    o_ref[0] = layer_norm(y + ffn, g2_ref, be2_ref).astype(o_ref.dtype)


def encoder_block(x, valid_lens_i32, params, *, num_heads, tq=None):
    """One BERT EncoderBlock.  x: (B,T,H) bf16, valid_lens_i32: (B,) int32."""
    B, T, H = x.shape
    assert H % num_heads == 0
    hd = H // num_heads
    if tq is None:
        limit = 512 if _vmem_cap() >= (96 << 20) else 256      # big tiles on 128-MiB parts
        tq = _pick_tile(T, limit, 8)
    assert T % tq == 0 and (tq == T or tq % 8 == 0)
    nq = T // tq

    x_spec = pl.BlockSpec((1, T, H), lambda b, qi, vl: (b, 0, 0))
    out_spec = pl.BlockSpec((1, tq, H), lambda b, qi, vl: (b, qi, 0))
    in_specs = [x_spec] + [_const_spec(p.shape, 3) for p in params]

    grid_spec = pltpu.PrefetchScalarGridSpec(
        num_scalar_prefetch=1,                                 # valid_lens -> SMEM
        grid=(B, nq),
        in_specs=in_specs,
        out_specs=out_spec,
        scratch_shapes=[pltpu.VMEM((num_heads, T, hd), jnp.bfloat16),   # K heads
                        pltpu.VMEM((num_heads, T, hd), jnp.bfloat16)],  # V heads
    )
    return pl.pallas_call(
        functools.partial(encoder_block_kernel, num_heads=num_heads, tq=tq),
        out_shape=jax.ShapeDtypeStruct((B, T, H), x.dtype),
        grid_spec=grid_spec,
        compiler_params=pltpu.CompilerParams(
            # batch axis parallel (megacore), query-tile axis arbitrary (K/V scratch carry)
            dimension_semantics=("parallel", "arbitrary"),
            vmem_limit_bytes=_vmem_limit_bytes()),
    )(valid_lens_i32, x, *params)


# ---------------------------------------------------------------------------
# MaskLM head:  Linear -> ReLU -> LayerNorm -> Linear   (on gathered positions)
# Grid over (row tiles, vocab column tiles); hidden LayerNorm cached in scratch.
# ---------------------------------------------------------------------------
def mlm_head_kernel(x_ref, w1_ref, b1_ref, g_ref, be_ref, w2_ref, b2_ref,
                    o_ref, hn_ref):
    @pl.when(pl.program_id(1) == 0)
    def _():
        h = jnp.dot(x_ref[...], w1_ref[...], preferred_element_type=jnp.float32) + b1_ref[...]
        h = jnp.maximum(h, 0.0)
        mu = jnp.mean(h, axis=-1, keepdims=True)
        var = jnp.mean(jnp.square(h - mu), axis=-1, keepdims=True)
        hn_ref[...] = (h - mu) * lax.rsqrt(var + 1e-5) * g_ref[...] + be_ref[...]
    o_ref[...] = (jnp.dot(hn_ref[...].astype(jnp.bfloat16), w2_ref[...],
                          preferred_element_type=jnp.float32) + b2_ref[...]).astype(o_ref.dtype)


def mlm_head(masked_x, params):
    """masked_x: (M, H) bf16 -> (M, V) bf16 logits (bf16 halves the writeback traffic)."""
    M, H = masked_x.shape
    w1, b1, g, be, w2, b2 = params
    V = w2.shape[1]
    tm = _pick_tile(M, 256, 8)
    tv = _pick_tile(V, 1024, 128)                              # lane-dense vocab tiles
    nm, nv = M // tm, V // tv

    grid_spec = pltpu.PrefetchScalarGridSpec(
        num_scalar_prefetch=0,
        grid=(nm, nv),
        in_specs=[pl.BlockSpec((tm, H), lambda mi, vj: (mi, 0)),
                  _const_spec(w1.shape, 2), _const_spec(b1.shape, 2),
                  _const_spec(g.shape, 2), _const_spec(be.shape, 2),
                  pl.BlockSpec((H, tv), lambda mi, vj: (0, vj)),
                  pl.BlockSpec((1, tv), lambda mi, vj: (0, vj))],
        out_specs=pl.BlockSpec((tm, tv), lambda mi, vj: (mi, vj)),
        scratch_shapes=[pltpu.VMEM((tm, H), jnp.float32)],
    )
    return pl.pallas_call(
        mlm_head_kernel,
        out_shape=jax.ShapeDtypeStruct((M, V), jnp.bfloat16),
        grid_spec=grid_spec,
        compiler_params=pltpu.CompilerParams(
            dimension_semantics=("parallel", "arbitrary"),
            vmem_limit_bytes=_vmem_limit_bytes()),
    )(masked_x, *params)


# ---------------------------------------------------------------------------
# hidden (Linear+Tanh on [CLS]) + NextSentencePred (Linear -> 2) — tiny, single block
# ---------------------------------------------------------------------------
def nsp_head_kernel(cls_ref, wh_ref, bh_ref, wn_ref, bn_ref, o_ref):
    h = jnp.tanh(jnp.dot(cls_ref[...], wh_ref[...],
                         preferred_element_type=jnp.float32) + bh_ref[...])
    o_ref[...] = (jnp.dot(h.astype(jnp.bfloat16), wn_ref[...],
                          preferred_element_type=jnp.float32) + bn_ref[...]).astype(o_ref.dtype)


def nsp_head(cls_x, params):
    B = cls_x.shape[0]
    vspec = pl.BlockSpec(memory_space=pltpu.MemorySpace.VMEM)
    inputs = (cls_x,) + tuple(params)
    return pl.pallas_call(
        nsp_head_kernel,
        out_shape=jax.ShapeDtypeStruct((B, 2), jnp.float32),
        in_specs=[vspec] * len(inputs),
        out_specs=vspec,
        compiler_params=pltpu.CompilerParams(vmem_limit_bytes=_vmem_limit_bytes()),
    )(*inputs)


# ---------------------------------------------------------------------------
# Parameter initialization (weights stored bf16; biases / LN params f32).
# W_q / b_q are pre-scaled by 1/sqrt(head_dim) (one-time host-side transform).
# ---------------------------------------------------------------------------
def fold_attention_scale(params, num_heads):
    (wq, bq, wk, bk, wv, bv, wo, bo, g1, be1, w1, b1, w2, b2, g2, be2) = params
    hd = wq.shape[1] // num_heads
    s = 1.0 / math.sqrt(hd)
    wq = (wq.astype(jnp.float32) * s).astype(wq.dtype)
    bq = bq * s
    return (wq, bq, wk, bk, wv, bv, wo, bo, g1, be1, w1, b1, w2, b2, g2, be2)


def init_encoder_layer_params(key, H, F, num_heads, scale=0.02):
    ks = jax.random.split(key, 12)

    def w(k, shape):
        return (jax.random.normal(k, shape, jnp.float32) * scale).astype(jnp.bfloat16)

    def bias(k, n):
        return jax.random.normal(k, (1, n), jnp.float32) * scale

    wq, wk, wv, wo = w(ks[0], (H, H)), w(ks[1], (H, H)), w(ks[2], (H, H)), w(ks[3], (H, H))
    bq, bk, bv, bo = bias(ks[4], H), bias(ks[5], H), bias(ks[6], H), bias(ks[7], H)
    w1, b1 = w(ks[8], (H, F)), bias(ks[9], F)
    w2, b2 = w(ks[10], (F, H)), bias(ks[11], H)
    g1, be1 = jnp.ones((1, H), jnp.float32), jnp.zeros((1, H), jnp.float32)
    g2, be2 = jnp.ones((1, H), jnp.float32), jnp.zeros((1, H), jnp.float32)
    params = (wq, bq, wk, bk, wv, bv, wo, bo, g1, be1, w1, b1, w2, b2, g2, be2)
    return fold_attention_scale(params, num_heads)


# ---------------------------------------------------------------------------
# Full BERTModel forward
# ---------------------------------------------------------------------------
def bert_model_forward(tokens, segments, valid_lens, pred_positions,
                       tok_emb, seg_emb, pos_emb, layer_params,
                       mlm_params, hidden_nsp_params, *, num_heads):
    B, T = tokens.shape
    # TODO(synk): token/segment embedding lookups are data-dependent gathers -> plain-JAX glue.
    X = tok_emb[tokens] + seg_emb[segments] + pos_emb[:, :T, :]
    X = X.astype(jnp.bfloat16)                                 # inter-layer activations in bf16
    vl = valid_lens.astype(jnp.int32)
    for p in layer_params:
        X = encoder_block(X, vl, p, num_heads=num_heads)
    encoded = X

    mlm_y = None
    if pred_positions is not None:
        P = pred_positions.shape[1]
        # TODO(synk): pred-position gather is data-dependent -> plain-JAX glue.
        masked = encoded[jnp.arange(B)[:, None], pred_positions]   # (B, P, H) bf16
        mlm_y = mlm_head(masked.reshape(B * P, -1), mlm_params).reshape(B, P, -1)

    nsp_y = nsp_head(encoded[:, 0, :], hidden_nsp_params)
    return encoded.astype(jnp.float32), mlm_y, nsp_y


if __name__ == "__main__":
    # Small, forward-consistent shapes
    vocab_size, H, F, num_heads, num_layers = 100, 32, 64, 4, 2
    B, T, max_len, P = 2, 8, 16, 3

    key = jax.random.PRNGKey(0)
    k_tok, k_seg, k_pos, k_lay, k_mlm, k_nsp, k_ids = jax.random.split(key, 7)

    tok_emb = jax.random.normal(k_tok, (vocab_size, H), jnp.float32) * 0.02
    seg_emb = jax.random.normal(k_seg, (2, H), jnp.float32) * 0.02
    pos_emb = jax.random.normal(k_pos, (1, max_len, H), jnp.float32)   # nn.Parameter(randn)

    layer_params = [init_encoder_layer_params(jax.random.fold_in(k_lay, i), H, F, num_heads)
                    for i in range(num_layers)]

    km = jax.random.split(k_mlm, 4)
    mlm_params = (
        (jax.random.normal(km[0], (H, H), jnp.float32) * 0.02).astype(jnp.bfloat16),
        jax.random.normal(km[1], (1, H), jnp.float32) * 0.02,
        jnp.ones((1, H), jnp.float32), jnp.zeros((1, H), jnp.float32),
        (jax.random.normal(km[2], (H, vocab_size), jnp.float32) * 0.02).astype(jnp.bfloat16),
        jax.random.normal(km[3], (1, vocab_size), jnp.float32) * 0.02,
    )
    kn = jax.random.split(k_nsp, 4)
    hidden_nsp_params = (
        (jax.random.normal(kn[0], (H, H), jnp.float32) * 0.02).astype(jnp.bfloat16),
        jax.random.normal(kn[1], (1, H), jnp.float32) * 0.02,
        (jax.random.normal(kn[2], (H, 2), jnp.float32) * 0.02).astype(jnp.bfloat16),
        jax.random.normal(kn[3], (1, 2), jnp.float32) * 0.02,
    )

    tokens = jax.random.randint(k_ids, (B, T), 0, vocab_size, dtype=jnp.int32)
    segments = jnp.concatenate(
        [jnp.zeros((B, T // 2), jnp.int32), jnp.ones((B, T // 2), jnp.int32)], axis=1)
    valid_lens = jnp.array([T, 5], dtype=jnp.int32)
    pred_positions = jnp.array([[1, 5, 2], [6, 1, 5]], dtype=jnp.int32)

    encoded, mlm_y, nsp_y = bert_model_forward(
        tokens, segments, valid_lens, pred_positions,
        tok_emb, seg_emb, pos_emb, layer_params, mlm_params, hidden_nsp_params,
        num_heads=num_heads)
    encoded = jax.block_until_ready(encoded)
    mlm_y = jax.block_until_ready(mlm_y)
    nsp_y = jax.block_until_ready(nsp_y)

    assert encoded.shape == (B, T, H)
    assert mlm_y.shape == (B, P, vocab_size)
    assert nsp_y.shape == (B, 2)
    assert jnp.all(jnp.isfinite(encoded))
    assert jnp.all(jnp.isfinite(mlm_y.astype(jnp.float32)))
    assert jnp.all(jnp.isfinite(nsp_y))
    print("KERNEL_OK")
</pallas_src>

<mosaic_0001>
module attributes {stable_mosaic.version = 11 : i64} {
  func.func @_copy_kernel(%arg0: i32, %arg1: memref<8x128xf32, #tpu.memory_space<vmem>>, %arg2: memref<8x128xf32, #tpu.memory_space<vmem>>) attributes {dimension_semantics = [#tpu.dimension_semantics<arbitrary>], iteration_bounds = array<i64: 2>, scalar_prefetch = 0 : i64, scratch_operands = 0 : i64, tpu.core_type = #tpu.core_type<tc>, window_params = [{pipeline_mode = #tpu.pipeline_mode<synchronous>, transform_indices = @transform_0, window_bounds = array<i64: 8, 128>}, {transform_indices = @transform_1, window_bounds = array<i64: 8, 128>}]} {
    %c0 = arith.constant 0 : index
    %c0_0 = arith.constant 0 : index
    %0 = vector.load %arg1[%c0, %c0_0] : memref<8x128xf32, #tpu.memory_space<vmem>>, vector<8x128xf32>
    %cst = arith.constant 1.000000e+00 : f32
    %1 = vector.broadcast %cst : f32 to vector<8x128xf32>
    %2 = arith.addf %0, %1 : vector<8x128xf32>
    %c0_1 = arith.constant 0 : index
    %c0_2 = arith.constant 0 : index
    %3 = vector.load %arg2[%c0_1, %c0_2] : memref<8x128xf32, #tpu.memory_space<vmem>>, vector<8x128xf32>
    tpu.vector_store %arg2[%c0_1, %c0_2], %2 {strides = array<i32>} : memref<8x128xf32, #tpu.memory_space<vmem>>, vector<8x128xf32>,
    return
  }
  func.func @transform_0(%arg0: i32) -> (i32, i32) {
    %c0_i32 = arith.constant 0 : i32
    %c0_i32_0 = arith.constant 0 : i32
    %c0_i32_1 = arith.constant 0 : i32
    return %c0_i32, %c0_i32_0 : i32, i32
  }
  func.func @transform_1(%arg0: i32) -> (i32, i32) {
    %c0_i32 = arith.constant 0 : i32
    %c0_i32_0 = arith.constant 0 : i32
    return %arg0, %c0_i32 : i32, i32
  }
}

module attributes {stable_mosaic.version = 11 : i64} {
  func.func @encoder_block_kernel(%arg0: i32, %arg1: i32, %arg2: memref<2xi32, #tpu.memory_space<smem>>, %arg3: memref<1x8x32xbf16, #tpu.memory_space<vmem>>, %arg4: memref<32x32xbf16, #tpu.memory_space<vmem>>, %arg5: memref<1x32xf32, #tpu.memory_space<vmem>>, %arg6: memref<32x32xbf16, #tpu.memory_space<vmem>>, %arg7: memref<1x32xf32, #tpu.memory_space<vmem>>, %arg8: memref<32x32xbf16, #tpu.memory_space<vmem>>, %arg9: memref<1x32xf32, #tpu.memory_space<vmem>>, %arg10: memref<32x32xbf16, #tpu.memory_space<vmem>>, %arg11: memref<1x32xf32, #tpu.memory_space<vmem>>, %arg12: memref<1x32xf32, #tpu.memory_space<vmem>>, %arg13: memref<1x32xf32, #tpu.memory_space<vmem>>, %arg14: memref<32x64xbf16, #tpu.memory_space<vmem>>, %arg15: memref<1x64xf32, #tpu.memory_space<vmem>>, %arg16: memref<64x32xbf16, #tpu.memory_space<vmem>>, %arg17: memref<1x32xf32, #tpu.memory_space<vmem>>, %arg18: memref<1x32xf32, #tpu.memory_space<vmem>>, %arg19: memref<1x32xf32, #tpu.memory_space<vmem>>, %arg20: memref<1x8x32xbf16, #tpu.memory_space<vmem>>, %arg21: memref<4x8x8xbf16, #tpu.memory_space<vmem>>, %arg22: memref<4x8x8xbf16, #tpu.memory_space<vmem>>) attributes {dimension_semantics = [#tpu.dimension_semantics<parallel>, #tpu.dimension_semantics<arbitrary>], iteration_bounds = array<i64: 2, 1>, scalar_prefetch = 1 : i64, scratch_operands = 2 : i64, tpu.core_type = #tpu.core_type<tc>, window_params = [{transform_indices = @transform_0, window_bounds = array<i64: 1, 8, 32>}, {pipeline_mode = #tpu.pipeline_mode<synchronous>, transform_indices = @transform_1, window_bounds = array<i64: 32, 32>}, {pipeline_mode = #tpu.pipeline_mode<synchronous>, transform_indices = @transform_2, window_bounds = array<i64: 1, 32>}, {pipeline_mode = #tpu.pipeline_mode<synchronous>, transform_indices = @transform_3, window_bounds = array<i64: 32, 32>}, {pipeline_mode = #tpu.pipeline_mode<synchronous>, transform_indices = @transform_4, window_bounds = array<i64: 1, 32>}, {pipeline_mode = #tpu.pipeline_mode<synchronous>, transform_indices = @transform_5, window_bounds = array<i64: 32, 32>}, {pipeline_mode = #tpu.pipeline_mode<synchronous>, transform_indices = @transform_6, window_bounds = array<i64: 1, 32>}, {pipeline_mode = #tpu.pipeline_mode<synchronous>, transform_indices = @transform_7, window_bounds = array<i64: 32, 32>}, {pipeline_mode = #tpu.pipeline_mode<synchronous>, transform_indices = @transform_8, window_bounds = array<i64: 1, 32>}, {pipeline_mode = #tpu.pipeline_mode<synchronous>, transform_indices = @transform_9, window_bounds = array<i64: 1, 32>}, {pipeline_mode = #tpu.pipeline_mode<synchronous>, transform_indices = @transform_10, window_bounds = array<i64: 1, 32>}, {pipeline_mode = #tpu.pipeline_mode<synchronous>, transform_indices = @transform_11, window_bounds = array<i64: 32, 64>}, {pipeline_mode = #tpu.pipeline_mode<synchronous>, transform_indices = @transform_12, window_bounds = array<i64: 1, 64>}, {pipeline_mode = #tpu.pipeline_mode<synchronous>, transform_indices = @transform_13, window_bounds = array<i64: 64, 32>}, {pipeline_mode = #tpu.pipeline_mode<synchronous>, transform_indices = @transform_14, window_bounds = array<i64: 1, 32>}, {pipeline_mode = #tpu.pipeline_mode<synchronous>, transform_indices = @transform_15, window_bounds = array<i64: 1, 32>}, {pipeline_mode = #tpu.pipeline_mode<synchronous>, transform_indices = @transform_16, window_bounds = array<i64: 1, 32>}, {transform_indices = @transform_17, window_bounds = array<i64: 1, 8, 32>}]} {
    %c0_i32 = arith.constant 0 : i32
    %0 = arith.cmpi eq, %arg1, %c0_i32 : i32
    %1 = arith.extui %0 : i1 to i32
    %c0_i32_0 = arith.constant 0 : i32
    %2 = arith.cmpi ne, %1, %c0_i32_0 : i32
    scf.if %2 {
      %c0_54 = arith.constant 0 : index
      %c0_55 = arith.constant 0 : index
      %c0_56 = arith.constant 0 : index
      %117 = vector.load %arg3[%c0_54, %c0_55, %c0_56] : memref<1x8x32xbf16, #tpu.memory_space<vmem>>, vector<1x8x32xbf16>
      %118 = vector.shape_cast %117 : vector<1x8x32xbf16> to vector<8x32xbf16>
      %c0_57 = arith.constant 0 : index
      %c0_58 = arith.constant 0 : index
      %119 = vector.load %arg6[%c0_57, %c0_58] : memref<32x32xbf16, #tpu.memory_space<vmem>>, vector<32x32xbf16>
      %cst_59 = arith.constant dense<0.000000e+00> : vector<8x32xf32>
      %120 = tpu.matmul %118, %119, %cst_59 {dimension_numbers = #tpu.dot_dimension_numbers<[1], [0], [0], [1], [0, 0, 1, 1], [], []>} : vector<8x32xbf16>, vector<32x32xbf16>, vector<8x32xf32> -> vector<8x32xf32>
      %c0_60 = arith.constant 0 : index
      %c0_61 = arith.constant 0 : index
      %121 = vector.load %arg7[%c0_60, %c0_61] : memref<1x32xf32, #tpu.memory_space<vmem>>, vector<1x32xf32>
      %122 = vector.broadcast %121 : vector<1x32xf32> to vector<8x32xf32>
      %123 = arith.addf %120, %122 : vector<8x32xf32>
      %c0_62 = arith.constant 0 : index
      %c0_63 = arith.constant 0 : index
      %124 = vector.load %arg8[%c0_62, %c0_63] : memref<32x32xbf16, #tpu.memory_space<vmem>>, vector<32x32xbf16>
      %cst_64 = arith.constant dense<0.000000e+00> : vector<8x32xf32>
      %125 = tpu.matmul %118, %124, %cst_64 {dimension_numbers = #tpu.dot_dimension_numbers<[1], [0], [0], [1], [0, 0, 1, 1], [], []>} : vector<8x32xbf16>, vector<32x32xbf16>, vector<8x32xf32> -> vector<8x32xf32>
      %c0_65 = arith.constant 0 : index
      %c0_66 = arith.constant 0 : index
      %126 = vector.load %arg9[%c0_65, %c0_66] : memref<1x32xf32, #tpu.memory_space<vmem>>, vector<1x32xf32>
      %127 = vector.broadcast %126 : vector<1x32xf32> to vector<8x32xf32>
      %128 = arith.addf %125, %127 : vector<8x32xf32>
      %129 = arith.truncf %123 : vector<8x32xf32> to vector<8x32xbf16>
      %130 = vector.shape_cast %129 : vector<8x32xbf16> to vector<8x4x8xbf16>
      %131 = tpu.transpose %130, [1, 0, 2] : vector<8x4x8xbf16> -> vector<4x8x8xbf16>
      %c0_67 = arith.constant 0 : index
      %c0_68 = arith.constant 0 : index
      %c0_69 = arith.constant 0 : index
      %132 = vector.load %arg21[%c0_67, %c0_68, %c0_69] : memref<4x8x8xbf16, #tpu.memory_space<vmem>>, vector<4x8x8xbf16>
      tpu.vector_store %arg21[%c0_67, %c0_68, %c0_69], %131 {strides = array<i32>} : memref<4x8x8xbf16, #tpu.memory_space<vmem>>, vector<4x8x8xbf16>,
      %133 = arith.truncf %128 : vector<8x32xf32> to vector<8x32xbf16>
      %134 = vector.shape_cast %133 : vector<8x32xbf16> to vector<8x4x8xbf16>
      %135 = tpu.transpose %134, [1, 0, 2] : vector<8x4x8xbf16> -> vector<4x8x8xbf16>
      %c0_70 = arith.constant 0 : index
      %c0_71 = arith.constant 0 : index
      %c0_72 = arith.constant 0 : index
      %136 = vector.load %arg22[%c0_70, %c0_71, %c0_72] : memref<4x8x8xbf16, #tpu.memory_space<vmem>>, vector<4x8x8xbf16>
      tpu.vector_store %arg22[%c0_70, %c0_71, %c0_72], %135 {strides = array<i32>} : memref<4x8x8xbf16, #tpu.memory_space<vmem>>, vector<4x8x8xbf16>,
    } else {
    }
    %c8_i32 = arith.constant 8 : i32
    %3 = arith.muli %arg1, %c8_i32 : i32
    %4 = tpu.assume_multiple %3, 8 : i32
    %c0 = arith.constant 0 : index
    %5 = arith.index_cast %4 : i32 to index
    %c0_1 = arith.constant 0 : index
    %6 = vector.load %arg3[%c0, %5, %c0_1] : memref<1x8x32xbf16, #tpu.memory_space<vmem>>, vector<1x8x32xbf16>
    %7 = vector.shape_cast %6 : vector<1x8x32xbf16> to vector<8x32xbf16>
    %c0_2 = arith.constant 0 : index
    %c0_3 = arith.constant 0 : index
    %8 = vector.load %arg4[%c0_2, %c0_3] : memref<32x32xbf16, #tpu.memory_space<vmem>>, vector<32x32xbf16>
    %cst = arith.constant dense<0.000000e+00> : vector<8x32xf32>
    %9 = tpu.matmul %7, %8, %cst {dimension_numbers = #tpu.dot_dimension_numbers<[1], [0], [0], [1], [0, 0, 1, 1], [], []>} : vector<8x32xbf16>, vector<32x32xbf16>, vector<8x32xf32> -> vector<8x32xf32>
    %c0_4 = arith.constant 0 : index
    %c0_5 = arith.constant 0 : index
    %10 = vector.load %arg5[%c0_4, %c0_5] : memref<1x32xf32, #tpu.memory_space<vmem>>, vector<1x32xf32>
    %11 = vector.broadcast %10 : vector<1x32xf32> to vector<8x32xf32>
    %12 = arith.addf %9, %11 : vector<8x32xf32>
    %13 = arith.truncf %12 : vector<8x32xf32> to vector<8x32xbf16>
    %14 = vector.shape_cast %13 : vector<8x32xbf16> to vector<8x4x8xbf16>
    %15 = tpu.transpose %14, [1, 0, 2] : vector<8x4x8xbf16> -> vector<4x8x8xbf16>
    %c0_6 = arith.constant 0 : index
    %c0_7 = arith.constant 0 : index
    %c0_8 = arith.constant 0 : index
    %16 = vector.load %arg21[%c0_6, %c0_7, %c0_8] : memref<4x8x8xbf16, #tpu.memory_space<vmem>>, vector<4x8x8xbf16>
    "tpu.trace_start"() <{level = 10 : i32, message = "hqd,hkd->hqk"}> : () -> ()
    %cst_9 = arith.constant dense<0.000000e+00> : vector<4x8x8xf32>
    %17 = tpu.matmul %15, %16, %cst_9 {dimension_numbers = #tpu.dot_dimension_numbers<[2], [2], [1], [1], [0, 0, 0, 1, 1, 1], [0], [0]>} : vector<4x8x8xbf16>, vector<4x8x8xbf16>, vector<4x8x8xf32> -> vector<4x8x8xf32>
    "tpu.trace_stop"() : () -> ()
    %18 = arith.index_cast %arg0 : i32 to index
    %19 = memref.load %arg2[%18] : memref<2xi32, #tpu.memory_space<smem>>
    %20 = tpu.iota {dimensions = array<i32: 2>} : vector<1x1x8xi32>
    %21 = vector.broadcast %19 : i32 to vector<1x1x8xi32>
    %22 = arith.cmpi slt, %20, %21 : vector<1x1x8xi32>
    %cst_10 = arith.constant -1.000000e+06 : f32
    %23 = vector.shape_cast %22 : vector<1x1x8xi1> to vector<1x1x8xi1>
    %24 = vector.broadcast %23 : vector<1x1x8xi1> to vector<4x8x8xi1>
    %25 = vector.broadcast %cst_10 : f32 to vector<4x8x8xf32>
    %26 = arith.select %24, %17, %25 : vector<4x8x8xi1>, vector<4x8x8xf32>
    %cst_11 = arith.constant dense<0xFF800000> : vector<4x8xf32>
    %27 = vector.multi_reduction <maximumf>, %26, %cst_11 [2] : vector<4x8x8xf32> to vector<4x8xf32>
    %28 = vector.shape_cast %27 : vector<4x8xf32> to vector<4x8x1xf32>
    %29 = vector.broadcast %28 : vector<4x8x1xf32> to vector<4x8x8xf32>
    %30 = arith.subf %26, %29 : vector<4x8x8xf32>
    %31 = math.exp %30 : vector<4x8x8xf32>
    %cst_12 = arith.constant dense<0.000000e+00> : vector<4x8xf32>
    %32 = vector.multi_reduction <add>, %31, %cst_12 [2] : vector<4x8x8xf32> to vector<4x8xf32>
    %33 = vector.shape_cast %32 : vector<4x8xf32> to vector<4x8x1xf32>
    %34 = tpu.reciprocal %33 {approx = true} : vector<4x8x1xf32> -> vector<4x8x1xf32>
    %35 = vector.broadcast %34 : vector<4x8x1xf32> to vector<4x8x8xf32>
    %36 = arith.mulf %31, %35 : vector<4x8x8xf32>
    %37 = arith.truncf %36 : vector<4x8x8xf32> to vector<4x8x8xbf16>
    %c0_13 = arith.constant 0 : index
    %c0_14 = arith.constant 0 : index
    %c0_15 = arith.constant 0 : index
    %38 = vector.load %arg22[%c0_13, %c0_14, %c0_15] : memref<4x8x8xbf16, #tpu.memory_space<vmem>>, vector<4x8x8xbf16>
    "tpu.trace_start"() <{level = 10 : i32, message = "hqk,hkd->hqd"}> : () -> ()
    %cst_16 = arith.constant dense<0.000000e+00> : vector<4x8x8xf32>
    %39 = tpu.matmul %37, %38, %cst_16 {dimension_numbers = #tpu.dot_dimension_numbers<[2], [1], [1], [2], [0, 0, 0, 1, 1, 2], [0], [0]>} : vector<4x8x8xbf16>, vector<4x8x8xbf16>, vector<4x8x8xf32> -> vector<4x8x8xf32>
    "tpu.trace_stop"() : () -> ()
    %40 = arith.truncf %39 : vector<4x8x8xf32> to vector<4x8x8xbf16>
    %41 = tpu.transpose %40, [1, 0, 2] : vector<4x8x8xbf16> -> vector<8x4x8xbf16>
    %42 = vector.shape_cast %41 : vector<8x4x8xbf16> to vector<8x32xbf16>
    %c0_17 = arith.constant 0 : index
    %c0_18 = arith.constant 0 : index
    %43 = vector.load %arg10[%c0_17, %c0_18] : memref<32x32xbf16, #tpu.memory_space<vmem>>, vector<32x32xbf16>
    %cst_19 = arith.constant dense<0.000000e+00> : vector<8x32xf32>
    %44 = tpu.matmul %42, %43, %cst_19 {dimension_numbers = #tpu.dot_dimension_numbers<[1], [0], [0], [1], [0, 0, 1, 1], [], []>} : vector<8x32xbf16>, vector<32x32xbf16>, vector<8x32xf32> -> vector<8x32xf32>
    %c0_20 = arith.constant 0 : index
    %c0_21 = arith.constant 0 : index
    %45 = vector.load %arg11[%c0_20, %c0_21] : memref<1x32xf32, #tpu.memory_space<vmem>>, vector<1x32xf32>
    %46 = vector.broadcast %45 : vector<1x32xf32> to vector<8x32xf32>
    %47 = arith.addf %44, %46 : vector<8x32xf32>
    %48 = arith.extf %7 : vector<8x32xbf16> to vector<8x32xf32>
    %49 = arith.addf %48, %47 : vector<8x32xf32>
    %cst_22 = arith.constant dense<0.000000e+00> : vector<8xf32>
    %50 = vector.multi_reduction <add>, %49, %cst_22 [1] : vector<8x32xf32> to vector<8xf32>
    %51 = vector.shape_cast %50 : vector<8xf32> to vector<8x1xf32>
    %cst_23 = arith.constant 3.200000e+01 : f32
    %52 = vector.broadcast %cst_23 : f32 to vector<8x1xf32>
    %53 = arith.divf %51, %52 : vector<8x1xf32>
    %54 = vector.broadcast %53 : vector<8x1xf32> to vector<8x32xf32>
    %55 = arith.subf %49, %54 : vector<8x32xf32>
    %56 = arith.mulf %55, %55 : vector<8x32xf32>
    %cst_24 = arith.constant dense<0.000000e+00> : vector<8xf32>
    %57 = vector.multi_reduction <add>, %56, %cst_24 [1] : vector<8x32xf32> to vector<8xf32>
    %58 = vector.shape_cast %57 : vector<8xf32> to vector<8x1xf32>
    %cst_25 = arith.constant 3.200000e+01 : f32
    %59 = vector.broadcast %cst_25 : f32 to vector<8x1xf32>
    %60 = arith.divf %58, %59 : vector<8x1xf32>
    %61 = vector.broadcast %53 : vector<8x1xf32> to vector<8x32xf32>
    %62 = arith.subf %49, %61 : vector<8x32xf32>
    %cst_26 = arith.constant 9.99999974E-6 : f32
    %63 = vector.broadcast %cst_26 : f32 to vector<8x1xf32>
    %64 = arith.addf %60, %63 : vector<8x1xf32>
    %65 = math.rsqrt %64 : vector<8x1xf32>
    %66 = vector.broadcast %65 : vector<8x1xf32> to vector<8x32xf32>
    %67 = arith.mulf %62, %66 : vector<8x32xf32>
    %c0_27 = arith.constant 0 : index
    %c0_28 = arith.constant 0 : index
    %68 = vector.load %arg12[%c0_27, %c0_28] : memref<1x32xf32, #tpu.memory_space<vmem>>, vector<1x32xf32>
    %69 = vector.broadcast %68 : vector<1x32xf32> to vector<8x32xf32>
    %70 = arith.mulf %67, %69 : vector<8x32xf32>
    %c0_29 = arith.constant 0 : index
    %c0_30 = arith.constant 0 : index
    %71 = vector.load %arg13[%c0_29, %c0_30] : memref<1x32xf32, #tpu.memory_space<vmem>>, vector<1x32xf32>
    %72 = vector.broadcast %71 : vector<1x32xf32> to vector<8x32xf32>
    %73 = arith.addf %70, %72 : vector<8x32xf32>
    %74 = arith.truncf %73 : vector<8x32xf32> to vector<8x32xbf16>
    %c0_31 = arith.constant 0 : index
    %c0_32 = arith.constant 0 : index
    %75 = vector.load %arg14[%c0_31, %c0_32] : memref<32x64xbf16, #tpu.memory_space<vmem>>, vector<32x64xbf16>
    %cst_33 = arith.constant dense<0.000000e+00> : vector<8x64xf32>
    %76 = tpu.matmul %74, %75, %cst_33 {dimension_numbers = #tpu.dot_dimension_numbers<[1], [0], [0], [1], [0, 0, 1, 1], [], []>} : vector<8x32xbf16>, vector<32x64xbf16>, vector<8x64xf32> -> vector<8x64xf32>
    %c0_34 = arith.constant 0 : index
    %c0_35 = arith.constant 0 : index
    %77 = vector.load %arg15[%c0_34, %c0_35] : memref<1x64xf32, #tpu.memory_space<vmem>>, vector<1x64xf32>
    %78 = vector.broadcast %77 : vector<1x64xf32> to vector<8x64xf32>
    %79 = arith.addf %76, %78 : vector<8x64xf32>
    %cst_36 = arith.constant 0.000000e+00 : f32
    %80 = vector.broadcast %cst_36 : f32 to vector<8x64xf32>
    %81 = arith.maximumf %79, %80 : vector<8x64xf32>
    %82 = arith.truncf %81 : vector<8x64xf32> to vector<8x64xbf16>
    %c0_37 = arith.constant 0 : index
    %c0_38 = arith.constant 0 : index
    %83 = vector.load %arg16[%c0_37, %c0_38] : memref<64x32xbf16, #tpu.memory_space<vmem>>, vector<64x32xbf16>
    %cst_39 = arith.constant dense<0.000000e+00> : vector<8x32xf32>
    %84 = tpu.matmul %82, %83, %cst_39 {dimension_numbers = #tpu.dot_dimension_numbers<[1], [0], [0], [1], [0, 0, 1, 1], [], []>} : vector<8x64xbf16>, vector<64x32xbf16>, vector<8x32xf32> -> vector<8x32xf32>
    %c0_40 = arith.constant 0 : index
    %c0_41 = arith.constant 0 : index
    %85 = vector.load %arg17[%c0_40, %c0_41] : memref<1x32xf32, #tpu.memory_space<vmem>>, vector<1x32xf32>
    %86 = vector.broadcast %85 : vector<1x32xf32> to vector<8x32xf32>
    %87 = arith.addf %84, %86 : vector<8x32xf32>
    %88 = arith.addf %73, %87 : vector<8x32xf32>
    %cst_42 = arith.constant dense<0.000000e+00> : vector<8xf32>
    %89 = vector.multi_reduction <add>, %88, %cst_42 [1] : vector<8x32xf32> to vector<8xf32>
    %90 = vector.shape_cast %89 : vector<8xf32> to vector<8x1xf32>
    %cst_43 = arith.constant 3.200000e+01 : f32
    %91 = vector.broadcast %cst_43 : f32 to vector<8x1xf32>
    %92 = arith.divf %90, %91 : vector<8x1xf32>
    %93 = vector.broadcast %92 : vector<8x1xf32> to vector<8x32xf32>
    %94 = arith.subf %88, %93 : vector<8x32xf32>
    %95 = arith.mulf %94, %94 : vector<8x32xf32>
    %cst_44 = arith.constant dense<0.000000e+00> : vector<8xf32>
    %96 = vector.multi_reduction <add>, %95, %cst_44 [1] : vector<8x32xf32> to vector<8xf32>
    %97 = vector.shape_cast %96 : vector<8xf32> to vector<8x1xf32>
    %cst_45 = arith.constant 3.200000e+01 : f32
    %98 = vector.broadcast %cst_45 : f32 to vector<8x1xf32>
    %99 = arith.divf %97, %98 : vector<8x1xf32>
    %100 = vector.broadcast %92 : vector<8x1xf32> to vector<8x32xf32>
    %101 = arith.subf %88, %100 : vector<8x32xf32>
    %cst_46 = arith.constant 9.99999974E-6 : f32
    %102 = vector.broadcast %cst_46 : f32 to vector<8x1xf32>
    %103 = arith.addf %99, %102 : vector<8x1xf32>
    %104 = math.rsqrt %103 : vector<8x1xf32>
    %105 = vector.broadcast %104 : vector<8x1xf32> to vector<8x32xf32>
    %106 = arith.mulf %101, %105 : vector<8x32xf32>
    %c0_47 = arith.constant 0 : index
    %c0_48 = arith.constant 0 : index
    %107 = vector.load %arg18[%c0_47, %c0_48] : memref<1x32xf32, #tpu.memory_space<vmem>>, vector<1x32xf32>
    %108 = vector.broadcast %107 : vector<1x32xf32> to vector<8x32xf32>
    %109 = arith.mulf %106, %108 : vector<8x32xf32>
    %c0_49 = arith.constant 0 : index
    %c0_50 = arith.constant 0 : index
    %110 = vector.load %arg19[%c0_49, %c0_50] : memref<1x32xf32, #tpu.memory_space<vmem>>, vector<1x32xf32>
    %111 = vector.broadcast %110 : vector<1x32xf32> to vector<8x32xf32>
    %112 = arith.addf %109, %111 : vector<8x32xf32>
    %113 = arith.truncf %112 : vector<8x32xf32> to vector<8x32xbf16>
    %c0_51 = arith.constant 0 : index
    %c0_52 = arith.constant 0 : index
    %c0_53 = arith.constant 0 : index
    %114 = vector.load %arg20[%c0_51, %c0_52, %c0_53] : memref<1x8x32xbf16, #tpu.memory_space<vmem>>, vector<1x8x32xbf16>
    %115 = vector.shape_cast %114 : vector<1x8x32xbf16> to vector<8x32xbf16>
    %116 = vector.shape_cast %113 : vector<8x32xbf16> to vector<1x8x32xbf16>
    tpu.vector_store %arg20[%c0_51, %c0_52, %c0_53], %116 {strides = array<i32>} : memref<1x8x32xbf16, #tpu.memory_space<vmem>>, vector<1x8x32xbf16>,
    return
  }
  func.func @transform_0(%arg0: i32, %arg1: i32, %arg2: memref<2xi32, #tpu.memory_space<smem>>) -> (i32, i32, i32) {
    %c0_i32 = arith.constant 0 : i32
    %c0_i32_0 = arith.constant 0 : i32
    %c0_i32_1 = arith.constant 0 : i32
    return %arg0, %c0_i32, %c0_i32_0 : i32, i32, i32
  }
  func.func @transform_1(%arg0: i32, %arg1: i32, %arg2: memref<2xi32, #tpu.memory_space<smem>>) -> (i32, i32) {
    %c0_i32 = arith.constant 0 : i32
    %c0_i32_0 = arith.constant 0 : i32
    %c0_i32_1 = arith.constant 0 : i32
    return %c0_i32, %c0_i32_0 : i32, i32
  }
  func.func @transform_2(%arg0: i32, %arg1: i32, %arg2: memref<2xi32, #tpu.memory_space<smem>>) -> (i32, i32) {
    %c0_i32 = arith.constant 0 : i32
    %c0_i32_0 = arith.constant 0 : i32
    %c0_i32_1 = arith.constant 0 : i32
    return %c0_i32, %c0_i32_0 : i32, i32
  }
  func.func @transform_3(%arg0: i32, %arg1: i32, %arg2: memref<2xi32, #tpu.memory_space<smem>>) -> (i32, i32) {
    %c0_i32 = arith.constant 0 : i32
    %c0_i32_0 = arith.constant 0 : i32
    %c0_i32_1 = arith.constant 0 : i32
    return %c0_i32, %c0_i32_0 : i32, i32
  }
  func.func @transform_4(%arg0: i32, %arg1: i32, %arg2: memref<2xi32, #tpu.memory_space<smem>>) -> (i32, i32) {
    %c0_i32 = arith.constant 0 : i32
    %c0_i32_0 = arith.constant 0 : i32
    %c0_i32_1 = arith.constant 0 : i32
    return %c0_i32, %c0_i32_0 : i32, i32
  }
  func.func @transform_5(%arg0: i32, %arg1: i32, %arg2: memref<2xi32, #tpu.memory_space<smem>>) -> (i32, i32) {
    %c0_i32 = arith.constant 0 : i32
    %c0_i32_0 = arith.constant 0 : i32
    %c0_i32_1 = arith.constant 0 : i32
    return %c0_i32, %c0_i32_0 : i32, i32
  }
  func.func @transform_6(%arg0: i32, %arg1: i32, %arg2: memref<2xi32, #tpu.memory_space<smem>>) -> (i32, i32) {
    %c0_i32 = arith.constant 0 : i32
    %c0_i32_0 = arith.constant 0 : i32
    %c0_i32_1 = arith.constant 0 : i32
    return %c0_i32, %c0_i32_0 : i32, i32
  }
  func.func @transform_7(%arg0: i32, %arg1: i32, %arg2: memref<2xi32, #tpu.memory_space<smem>>) -> (i32, i32) {
    %c0_i32 = arith.constant 0 : i32
    %c0_i32_0 = arith.constant 0 : i32
    %c0_i32_1 = arith.constant 0 : i32
    return %c0_i32, %c0_i32_0 : i32, i32
  }
  func.func @transform_8(%arg0: i32, %arg1: i32, %arg2: memref<2xi32, #tpu.memory_space<smem>>) -> (i32, i32) {
    %c0_i32 = arith.constant 0 : i32
    %c0_i32_0 = arith.constant 0 : i32
    %c0_i32_1 = arith.constant 0 : i32
    return %c0_i32, %c0_i32_0 : i32, i32
  }
  func.func @transform_9(%arg0: i32, %arg1: i32, %arg2: memref<2xi32, #tpu.memory_space<smem>>) -> (i32, i32) {
    %c0_i32 = arith.constant 0 : i32
    %c0_i32_0 = arith.constant 0 : i32
    %c0_i32_1 = arith.constant 0 : i32
    return %c0_i32, %c0_i32_0 : i32, i32
  }
  func.func @transform_10(%arg0: i32, %arg1: i32, %arg2: memref<2xi32, #tpu.memory_space<smem>>) -> (i32, i32) {
    %c0_i32 = arith.constant 0 : i32
    %c0_i32_0 = arith.constant 0 : i32
    %c0_i32_1 = arith.constant 0 : i32
    return %c0_i32, %c0_i32_0 : i32, i32
  }
  func.func @transform_11(%arg0: i32, %arg1: i32, %arg2: memref<2xi32, #tpu.memory_space<smem>>) -> (i32, i32) {
    %c0_i32 = arith.constant 0 : i32
    %c0_i32_0 = arith.constant 0 : i32
    %c0_i32_1 = arith.constant 0 : i32
    return %c0_i32, %c0_i32_0 : i32, i32
  }
  func.func @transform_12(%arg0: i32, %arg1: i32, %arg2: memref<2xi32, #tpu.memory_space<smem>>) -> (i32, i32) {
    %c0_i32 = arith.constant 0 : i32
    %c0_i32_0 = arith.constant 0 : i32
    %c0_i32_1 = arith.constant 0 : i32
    return %c0_i32, %c0_i32_0 : i32, i32
  }
  func.func @transform_13(%arg0: i32, %arg1: i32, %arg2: memref<2xi32, #tpu.memory_space<smem>>) -> (i32, i32) {
    %c0_i32 = arith.constant 0 : i32
    %c0_i32_0 = arith.constant 0 : i32
    %c0_i32_1 = arith.constant 0 : i32
    return %c0_i32, %c0_i32_0 : i32, i32
  }
  func.func @transform_14(%arg0: i32, %arg1: i32, %arg2: memref<2xi32, #tpu.memory_space<smem>>) -> (i32, i32) {
    %c0_i32 = arith.constant 0 : i32
    %c0_i32_0 = arith.constant 0 : i32
    %c0_i32_1 = arith.constant 0 : i32
    return %c0_i32, %c0_i32_0 : i32, i32
  }
  func.func @transform_15(%arg0: i32, %arg1: i32, %arg2: memref<2xi32, #tpu.memory_space<smem>>) -> (i32, i32) {
    %c0_i32 = arith.constant 0 : i32
    %c0_i32_0 = arith.constant 0 : i32
    %c0_i32_1 = arith.constant 0 : i32
    return %c0_i32, %c0_i32_0 : i32, i32
  }
  func.func @transform_16(%arg0: i32, %arg1: i32, %arg2: memref<2xi32, #tpu.memory_space<smem>>) -> (i32, i32) {
    %c0_i32 = arith.constant 0 : i32
    %c0_i32_0 = arith.constant 0 : i32
    %c0_i32_1 = arith.constant 0 : i32
    return %c0_i32, %c0_i32_0 : i32, i32
  }
  func.func @transform_17(%arg0: i32, %arg1: i32, %arg2: memref<2xi32, #tpu.memory_space<smem>>) -> (i32, i32, i32) {
    %c0_i32 = arith.constant 0 : i32
    %c0_i32_0 = arith.constant 0 : i32
    return %arg0, %arg1, %c0_i32 : i32, i32, i32
  }
}

</mosaic_0001>

<llo_original>
// kernel: tpu_custom_call.1
$region0: #{tpu_custom_call.1}
  #allocation0 [shape = 'u32[]', space=smem, size = 0x4, offset = 0x4, fixed_abs, tag = 'smem constant byte address 0x4 - core index']
  #allocation1 [shape = 'u32[72,128]{1,0:T(1,128)}', space=vmem, size = 0x9000, scoped, tag = 'internal scratch']
  %s0 = inlined_call_operand.hbm [shape: f32[8,128], index: 0, kind: input, shape index: {}]
  %s1 = inlined_call_operand.hbm [shape: f32[16,128], index: 1, kind: output, shape index: {}]
  %s2 = sld [smem:[#allocation0]]
  $region41: #{tpu_custom_call.1} parent=0
    _
  %s4 = ssub.s32 1, %s2
  %s5 = scalar_select 0, %s4, %s2
  $region1: #{tpu_custom_call.1} parent=0
    #allocation2 [shape = 'u8[4096]{0}', space=vmem, size = 0x1000, scoped, tag = 'input window, operand 0, single buffered']
    #allocation3 [shape = 's32[2]{0}', space=sflag, size = 0x8, scoped, tag = 'scoped memory for tpu_custom_call.1']
    #allocation4 [shape = 's32[2]{0}', space=sflag, size = 0x8, scoped, tag = 'scoped memory for tpu_custom_call.1']
    #allocation5 [shape = 'u8[8192]{0}', space=vmem, size = 0x2000, scoped, tag = 'output window, operand 0']
    %6 = vsyncpa [#allocation3], 0
    %7 = vsyncpa [#allocation4], 0
    %s8 = scalar_lea.sflag [#allocation4], 1
    %9 = vsyncpa %s8, 0
    loop: start=0, step=1, limit=4
    $region2: #{tpu_custom_call.1} parent=1 // loop_pre_header
      _
    $region3: #{tpu_custom_call.1} parent=1 // loop_header
      %s11 = sphi 0, %s15
      %p12 = scmp.ge.s32.totalorder %s11, 4
      %s19 = sphi 0, %s19
      %s21 = sphi 0, %s19
      %s22 = sphi 0, %s21
      %s36 = sphi 0, %s22
      %s42 = sphi 0, %s44
      %s45 = sphi 0, %s42
      %s46 = sphi 0, %s45
      %s62 = sphi 0, %s46
    $region4: #{tpu_custom_call.1} parent=1 // loop_header_branch
      %14 = sbr.rel (%p12) target = $region8
    $region5: #{tpu_custom_call.1} parent=1 // loop_body
      %s16 = ssub.s32 %s11, 1
      %s17 = ssub.s32 %s11, 2
      %s18 = sadd.s32 %s11, 1
      %s20 = sadd.s32 %s19, 1
      %p23 = scmp.eq.s32.totalorder %s11, 1
      %p24 = scmp.ne.s32.totalorder %s19, %s21
      %p25 = scmp.eq.s32.totalorder %s11, 0
      %p26 = por %p24, %p25
      %p27 = scmp.ne.s32.totalorder %s19, %s21
      %p28 = scmp.eq.s32.totalorder %s16, 1
      %p29 = por %p27, %p28
      %p30 = scmp.ne.s32.totalorder %s21, %s22
      %p31 = scmp.eq.s32.totalorder %s16, 0
      %p32 = por %p30, %p31
      %p33 = scmp.ne.s32.totalorder %s21, %s22
      %p34 = scmp.eq.s32.totalorder %s17, 1
      %p35 = por %p33, %p34
      %p37 = scmp.ne.s32.totalorder %s22, %s36
      %p38 = scmp.eq.s32.totalorder %s17, 0
      %p39 = por %p37, %p38
      %s40 = ssub.s32 %s11, %s18
      %p41 = scmp.eq.s32.totalorder %s40, 0
      %s43 = sadd.s32 %s42, 1
      %s44 = scalar_select %p41, %s42, %s43
      %p47 = pneg %p41
      %p48 = scmp.eq.s32.totalorder %s11, 1
      %p49 = por %p47, %p48
      %p50 = scmp.ne.s32.totalorder %s42, %s45
      %p51 = scmp.eq.s32.totalorder %s11, 0
      %p52 = por %p50, %p51
      %p53 = scmp.ne.s32.totalorder %s42, %s45
      %p54 = scmp.eq.s32.totalorder %s16, 1
      %p55 = por %p53, %p54
      %p56 = scmp.ne.s32.totalorder %s45, %s46
      %p57 = scmp.eq.s32.totalorder %s16, 0
      %p58 = por %p56, %p57
      %p59 = scmp.ne.s32.totalorder %s45, %s46
      %p60 = scmp.eq.s32.totalorder %s17, 1
      %p61 = por %p59, %p60
      %p63 = scmp.ne.s32.totalorder %s46, %s62
      %p64 = scmp.eq.s32.totalorder %s17, 0
      %p65 = por %p63, %p64
      %p66 = scmp.le.s32.totalorder 1, %s11
      %p67 = scmp.lt.s32.totalorder %s11, 3
      %p68 = pnand %p66, %p67
      %p69 = pneg %p68
      // Predicated region
      $region9: #{tpu_custom_call.1} parent=5 // pred_check
        _
      $region10: #{tpu_custom_call.1} parent=5 // pred_check_branch
        %71 = sbr.rel (%p68) target = $region12
      $region11: #{tpu_custom_call.1} parent=5 // pred_region
        %s72 = ssub.s32 %s11, 1
        // Predicated region
        $region13: #{tpu_custom_call.1} parent=11 // pred_check
          %p73 = pneg %p32
        $region14: #{tpu_custom_call.1} parent=11 // pred_check_branch
          %75 = sbr.rel (%p73) target = $region16
        $region15: #{tpu_custom_call.1} parent=11 // pred_region
          %77 = vsyncadd [#allocation3], 0
          %s79 = sshll.u32 %s0, 4
          %s80 = int_to_ptr.hbm [resolvable:$true] %s79
          %s81 = sshll.u32 [#allocation2], 4
          %s82 = int_to_ptr.vmem [resolvable:$true] %s81
          %84 = dma.hbm_to_vmem [thread:$0]  %s80, 128, %s82, [#allocation3]
        $region16: #{tpu_custom_call.1} parent=11 // pred_fallthru
          _
      $region12: #{tpu_custom_call.1} parent=5 // pred_fallthru
        _
      %p85 = scmp.lt.s32.totalorder %s11, 2
      // Predicated region
      $region17: #{tpu_custom_call.1} parent=5 // pred_check
        %p86 = pneg %p85
      $region18: #{tpu_custom_call.1} parent=5 // pred_check_branch
        %88 = sbr.rel (%p86) target = $region20
      $region19: #{tpu_custom_call.1} parent=5 // pred_region
        _
      $region20: #{tpu_custom_call.1} parent=5 // pred_fallthru
        _
      %p89 = scmp.le.s32.totalorder 1, %s11
      %p90 = scmp.lt.s32.totalorder %s11, 3
      %p91 = pnand %p89, %p90
      %p92 = pneg %p91
      // Predicated region
      $region21: #{tpu_custom_call.1} parent=5 // pred_check
        _
      $region22: #{tpu_custom_call.1} parent=5 // pred_check_branch
        %94 = sbr.rel (%p91) target = $region24
      $region23: #{tpu_custom_call.1} parent=5 // pred_region
        %s95 = ssub.s32 %s11, 1
        // Predicated region
        $region25: #{tpu_custom_call.1} parent=23 // pred_check
          %p96 = pneg %p32
        $region26: #{tpu_custom_call.1} parent=23 // pred_check_branch
          %98 = sbr.rel (%p96) target = $region28
        $region27: #{tpu_custom_call.1} parent=23 // pred_region
          %100 = dma.done [#allocation3], 128
        $region28: #{tpu_custom_call.1} parent=23 // pred_fallthru
          _
        %p101 = pneg %p32
        %p102 = pneg %p29
        %p103 = pneg %p58
        %p104 = pneg %p55
        %s105 = sand.u32 %s45, 1
        %s106 = scalar_lea.sflag [#allocation4], %s105
        %s107 = sand.u32 %s45, 1
        %s108 = smul.addr %s107, 8
        %s109 = scalar_lea.vmem [#allocation5], %s108
        %v110 = vld [vmem:[#allocation2] sm:$0xff]
        %v111 = vadd.f32 %v110, 1.0
        %112 = vst [vmem:[%s109] sm:$0xff] %v111
        %s113 = sand.u32 %s45, 1
        %s114 = scalar_lea.sflag [#allocation4], %s113
        %s115 = sand.u32 %s45, 1
        %s116 = smul.addr %s115, 8
        %s117 = scalar_lea.vmem [#allocation5], %s116
        // Predicated region
        $region29: #{tpu_custom_call.1} parent=23 // pred_check
          %p118 = pneg %p55
        $region30: #{tpu_custom_call.1} parent=23 // pred_check_branch
          %120 = sbr.rel (%p118) target = $region32
        $region31: #{tpu_custom_call.1} parent=23 // pred_region
          %122 = vsyncadd %s114, 0
          %s123 = smul.addr %s16, 8
          %s124 = scalar_lea.hbm %s1, %s123
          %s126 = sshll.u32 %s117, 4
          %s127 = int_to_ptr.vmem [resolvable:$true] %s126
          %s128 = sshll.u32 %s124, 4
          %s129 = int_to_ptr.hbm [resolvable:$true] %s128
          %131 = dma.vmem_to_hbm [thread:$0]  %s127, 128, %s129, %s114
        $region32: #{tpu_custom_call.1} parent=23 // pred_fallthru
          _
      $region24: #{tpu_custom_call.1} parent=5 // pred_fallthru
        _
      %p132 = scmp.le.s32.totalorder 2, %s11
      // Predicated region
      $region33: #{tpu_custom_call.1} parent=5 // pred_check
        %p133 = pneg %p132
      $region34: #{tpu_custom_call.1} parent=5 // pred_check_branch
        %135 = sbr.rel (%p133) target = $region36
      $region35: #{tpu_custom_call.1} parent=5 // pred_region
        %s136 = ssub.s32 %s11, 2
        // Predicated region
        $region37: #{tpu_custom_call.1} parent=35 // pred_check
          %p137 = pneg %p61
        $region38: #{tpu_custom_call.1} parent=35 // pred_check_branch
          %139 = sbr.rel (%p137) target = $region40
        $region39: #{tpu_custom_call.1} parent=35 // pred_region
          %s140 = sand.u32 %s46, 1
          %s141 = scalar_lea.sflag [#allocation4], %s140
          %s142 = sand.u32 %s46, 1
          %s143 = smul.addr %s142, 8
          %s144 = scalar_lea.vmem [#allocation5], %s143
          %146 = dma.done %s141, 128
        $region40: #{tpu_custom_call.1} parent=35 // pred_fallthru
          _
      $region36: #{tpu_custom_call.1} parent=5 // pred_fallthru
        _
    $region6: #{tpu_custom_call.1} parent=1 // loop_footer
      %s15 = sadd.s32 1, %s11
    $region7: #{tpu_custom_call.1} parent=1 // loop_footer_branch
      %10 = sbr.rel target = $region3
    $region8: #{tpu_custom_call.1} parent=1 // loop_exit
      _
    %147 = vsyncpa [#allocation3], 1
    %s148 = scalar_lea.sflag [#allocation3], 1
    %149 = vsyncpa %s148, 1
    %150 = vsyncpa [#allocation4], 1
    %s151 = scalar_lea.sflag [#allocation4], 1
    %152 = vsyncpa %s151, 1

// kernel: tpu_custom_call.1
$region0: #{tpu_custom_call.1}
  #allocation0 [shape = 'u32[]', space=smem, size = 0x4, offset = 0x4, fixed_abs, tag = 'smem constant byte address 0x4 - core index']
  #allocation1 [shape = 'u32[72,128]{1,0:T(1,128)}', space=vmem, size = 0x9000, scoped, tag = 'internal scratch']
  #allocation2 [shape = 'bf16[4,8,8]{2,1,0:T(8,128)(2,1)}', space=vmem, size = 0x2000, scoped, tag = 'scratch operand']
  #allocation3 [shape = 'bf16[4,8,8]{2,1,0:T(8,128)(2,1)}', space=vmem, size = 0x2000, scoped, tag = 'scratch operand']
  #allocation4 [shape = 's32[1]{0}', space=sflag, size = 0x4, scoped, tag = 'scoped memory for tpu_custom_call.1']
  #allocation5 [shape = 'u8[512]{0}', space=smem, size = 0x200, scoped, tag = 'prefetched SMEM operand 0']
  %s0 = inlined_call_operand.hbm [shape: s32[2], index: 0, kind: input, shape index: {}]
  %s1 = inlined_call_operand.hbm [shape: bf16[2,8,32], index: 1, kind: input, shape index: {}]
  %s2 = inlined_call_operand.vmem [shape: bf16[32,32], index: 2, kind: input, shape index: {}]
  %s3 = inlined_call_operand.vmem [shape: f32[1,32], index: 3, kind: input, shape index: {}]
  %s4 = inlined_call_operand.vmem [shape: bf16[32,32], index: 4, kind: input, shape index: {}]
  %s5 = inlined_call_operand.vmem [shape: f32[1,32], index: 5, kind: input, shape index: {}]
  %s6 = inlined_call_operand.vmem [shape: bf16[32,32], index: 6, kind: input, shape index: {}]
  %s7 = inlined_call_operand.vmem [shape: f32[1,32], index: 7, kind: input, shape index: {}]
  %s8 = inlined_call_operand.hbm [shape: bf16[32,32], index: 8, kind: input, shape index: {}]
  %s9 = inlined_call_operand.vmem [shape: f32[1,32], index: 9, kind: input, shape index: {}]
  %s10 = inlined_call_operand.vmem [shape: f32[1,32], index: 10, kind: input, shape index: {}]
  %s11 = inlined_call_operand.vmem [shape: f32[1,32], index: 11, kind: input, shape index: {}]
  %s12 = inlined_call_operand.hbm [shape: bf16[32,64], index: 12, kind: input, shape index: {}]
  %s13 = inlined_call_operand.vmem [shape: f32[1,64], index: 13, kind: input, shape index: {}]
  %s14 = inlined_call_operand.vmem [shape: bf16[64,32], index: 14, kind: input, shape index: {}]
  %s15 = inlined_call_operand.vmem [shape: f32[1,32], index: 15, kind: input, shape index: {}]
  %s16 = inlined_call_operand.vmem [shape: f32[1,32], index: 16, kind: input, shape index: {}]
  %s17 = inlined_call_operand.vmem [shape: f32[1,32], index: 17, kind: input, shape index: {}]
  %s18 = inlined_call_operand.hbm [shape: bf16[2,8,32], index: 18, kind: output, shape index: {}]
  %s19 = sld [smem:[#allocation0]]
  $region117: #{tpu_custom_call.1} parent=0
    _
  %s21 = ssub.s32 1, %s19
  %s22 = scalar_select 0, %s21, %s19
  %s24 = sshll.u32 %s0, 4
  %s25 = int_to_ptr.hbm [resolvable:$true] %s24
  %27 = dma.hbm_to_smem %s25, 16, [#allocation5], [#allocation4]
  %29 = dma.done [#allocation4], 16
  %30 = sfence
  $region1: #{tpu_custom_call.1} parent=0
    #allocation6 [shape = 'u8[4096]{0}', space=vmem, size = 0x1000, scoped, tag = 'input window, operand 1']
    #allocation7 [shape = 's32[2]{0}', space=sflag, size = 0x8, scoped, tag = 'scoped memory for tpu_custom_call.1']
    #allocation8 [shape = 's32[2]{0}', space=sflag, size = 0x8, scoped, tag = 'scoped memory for tpu_custom_call.1']
    #allocation9 [shape = 'u8[8192]{0}', space=vmem, size = 0x2000, scoped, tag = 'input window, operand 8, single buffered']
    #allocation10 [shape = 's32[1]{0}', space=sflag, size = 0x4, scoped, tag = 'scoped memory for tpu_custom_call.1']
    #allocation11 [shape = 'u8[8192]{0}', space=vmem, size = 0x2000, scoped, tag = 'input window, operand 12, single buffered']
    #allocation12 [shape = 'u8[4096]{0}', space=vmem, size = 0x1000, scoped, tag = 'output window, operand 0']
    %31 = vsyncpa [#allocation7], 0
    %s32 = scalar_lea.sflag [#allocation7], 1
    %33 = vsyncpa %s32, 0
    %34 = vsyncpa [#allocation10], 0
    %35 = vsyncpa [#allocation8], 0
    %s36 = scalar_lea.sflag [#allocation8], 1
    %37 = vsyncpa %s36, 0
    loop: start=0, step=1, limit=4
    $region2: #{tpu_custom_call.1} parent=1 // loop_pre_header
      _
    $region3: #{tpu_custom_call.1} parent=1 // loop_header
      %s39 = sphi 0, %s43
      %p40 = scmp.ge.s32.totalorder %s39, 4
      %s46 = sphi 0, %s58
      %s47 = sphi 0, %s54
      %s48 = sphi 0, %s46
      %s49 = sphi 0, %s47
      %s50 = sphi 0, %s48
      %s51 = sphi 0, %s49
      %s61 = sphi 0, %s63
      %s64 = sphi 0, %s61
      %s65 = sphi 0, %s64
      %s81 = sphi 0, %s65
      %s85 = sphi 0, %s85
      %s87 = sphi 0, %s85
      %s88 = sphi 0, %s87
      %s102 = sphi 0, %s88
      %s106 = sphi 0, %s106
      %s108 = sphi 0, %s106
      %s109 = sphi 0, %s108
      %s123 = sphi 0, %s109
      %s127 = sphi 0, %s127
      %s129 = sphi 0, %s127
      %s130 = sphi 0, %s129
      %s144 = sphi 0, %s130
      %s148 = sphi 0, %s148
      %s150 = sphi 0, %s148
      %s151 = sphi 0, %s150
      %s165 = sphi 0, %s151
      %s169 = sphi 0, %s169
      %s171 = sphi 0, %s169
      %s172 = sphi 0, %s171
      %s186 = sphi 0, %s172
      %s190 = sphi 0, %s190
      %s192 = sphi 0, %s190
      %s193 = sphi 0, %s192
      %s207 = sphi 0, %s193
      %s211 = sphi 0, %s211
      %s213 = sphi 0, %s211
      %s214 = sphi 0, %s213
      %s228 = sphi 0, %s214
      %s232 = sphi 0, %s232
      %s234 = sphi 0, %s232
      %s235 = sphi 0, %s234
      %s249 = sphi 0, %s235
      %s253 = sphi 0, %s253
      %s255 = sphi 0, %s253
      %s256 = sphi 0, %s255
      %s270 = sphi 0, %s256
      %s274 = sphi 0, %s274
      %s276 = sphi 0, %s274
      %s277 = sphi 0, %s276
      %s291 = sphi 0, %s277
      %s295 = sphi 0, %s295
      %s297 = sphi 0, %s295
      %s298 = sphi 0, %s297
      %s312 = sphi 0, %s298
      %s316 = sphi 0, %s316
      %s318 = sphi 0, %s316
      %s319 = sphi 0, %s318
      %s333 = sphi 0, %s319
      %s337 = sphi 0, %s337
      %s339 = sphi 0, %s337
      %s340 = sphi 0, %s339
      %s354 = sphi 0, %s340
      %s358 = sphi 0, %s358
      %s360 = sphi 0, %s358
      %s361 = sphi 0, %s360
      %s375 = sphi 0, %s361
      %s379 = sphi 0, %s379
      %s381 = sphi 0, %s379
      %s382 = sphi 0, %s381
      %s396 = sphi 0, %s382
      %s400 = sphi 0, %s400
      %s402 = sphi 0, %s400
      %s403 = sphi 0, %s402
      %s417 = sphi 0, %s403
      %s425 = sphi 0, %s427
      %s428 = sphi 0, %s425
      %s429 = sphi 0, %s428
      %s445 = sphi 0, %s429
    $region4: #{tpu_custom_call.1} parent=1 // loop_header_branch
      %42 = sbr.rel (%p40) target = $region8
    $region5: #{tpu_custom_call.1} parent=1 // loop_body
      %s44 = ssub.s32 %s39, 1
      %s45 = ssub.s32 %s39, 2
      %s52 = sadd.s32 1, %s47
      %p53 = scmp.ge.s32.totalorder %s52, 1
      %s54 = scalar_select %p53, 0, %s52
      %s55 = sadd.s32 1, %s46
      %s56 = scalar_select %p53, %s55, %s46
      %p57 = scmp.ge.s32.totalorder %s56, 2
      %s58 = scalar_select %p57, 0, %s56
      %s59 = ssub.s32 %s46, %s58
      %p60 = scmp.eq.s32.totalorder %s59, 0
      %s62 = sadd.s32 %s61, 1
      %s63 = scalar_select %p60, %s61, %s62
      %p66 = pneg %p60
      %p67 = scmp.eq.s32.totalorder %s39, 1
      %p68 = por %p66, %p67
      %p69 = scmp.ne.s32.totalorder %s61, %s64
      %p70 = scmp.eq.s32.totalorder %s39, 0
      %p71 = por %p69, %p70
      %p72 = scmp.ne.s32.totalorder %s61, %s64
      %p73 = scmp.eq.s32.totalorder %s44, 1
      %p74 = por %p72, %p73
      %p75 = scmp.ne.s32.totalorder %s64, %s65
      %p76 = scmp.eq.s32.totalorder %s44, 0
      %p77 = por %p75, %p76
      %p78 = scmp.ne.s32.totalorder %s64, %s65
      %p79 = scmp.eq.s32.totalorder %s45, 1
      %p80 = por %p78, %p79
      %p82 = scmp.ne.s32.totalorder %s65, %s81
      %p83 = scmp.eq.s32.totalorder %s45, 0
      %p84 = por %p82, %p83
      %s86 = sadd.s32 %s85, 1
      %p89 = scmp.eq.s32.totalorder %s39, 1
      %p90 = scmp.ne.s32.totalorder %s85, %s87
      %p91 = scmp.eq.s32.totalorder %s39, 0
      %p92 = por %p90, %p91
      %p93 = scmp.ne.s32.totalorder %s85, %s87
      %p94 = scmp.eq.s32.totalorder %s44, 1
      %p95 = por %p93, %p94
      %p96 = scmp.ne.s32.totalorder %s87, %s88
      %p97 = scmp.eq.s32.totalorder %s44, 0
      %p98 = por %p96, %p97
      %p99 = scmp.ne.s32.totalorder %s87, %s88
      %p100 = scmp.eq.s32.totalorder %s45, 1
      %p101 = por %p99, %p100
      %p103 = scmp.ne.s32.totalorder %s88, %s102
      %p104 = scmp.eq.s32.totalorder %s45, 0
      %p105 = por %p103, %p104
      %s107 = sadd.s32 %s106, 1
      %p110 = scmp.eq.s32.totalorder %s39, 1
      %p111 = scmp.ne.s32.totalorder %s106, %s108
      %p112 = scmp.eq.s32.totalorder %s39, 0
      %p113 = por %p111, %p112
      %p114 = scmp.ne.s32.totalorder %s106, %s108
      %p115 = scmp.eq.s32.totalorder %s44, 1
      %p116 = por %p114, %p115
      %p117 = scmp.ne.s32.totalorder %s108, %s109
      %p118 = scmp.eq.s32.totalorder %s44, 0
      %p119 = por %p117, %p118
      %p120 = scmp.ne.s32.totalorder %s108, %s109
      %p121 = scmp.eq.s32.totalorder %s45, 1
      %p122 = por %p120, %p121
      %p124 = scmp.ne.s32.totalorder %s109, %s123
      %p125 = scmp.eq.s32.totalorder %s45, 0
      %p126 = por %p124, %p125
      %s128 = sadd.s32 %s127, 1
      %p131 = scmp.eq.s32.totalorder %s39, 1
      %p132 = scmp.ne.s32.totalorder %s127, %s129
      %p133 = scmp.eq.s32.totalorder %s39, 0
      %p134 = por %p132, %p133
      %p135 = scmp.ne.s32.totalorder %s127, %s129
      %p136 = scmp.eq.s32.totalorder %s44, 1
      %p137 = por %p135, %p136
      %p138 = scmp.ne.s32.totalorder %s129, %s130
      %p139 = scmp.eq.s32.totalorder %s44, 0
      %p140 = por %p138, %p139
      %p141 = scmp.ne.s32.totalorder %s129, %s130
      %p142 = scmp.eq.s32.totalorder %s45, 1
      %p143 = por %p141, %p142
      %p145 = scmp.ne.s32.totalorder %s130, %s144
      %p146 = scmp.eq.s32.totalorder %s45, 0
      %p147 = por %p145, %p146
      %s149 = sadd.s32 %s148, 1
      %p152 = scmp.eq.s32.totalorder %s39, 1
      %p153 = scmp.ne.s32.totalorder %s148, %s150
      %p154 = scmp.eq.s32.totalorder %s39, 0
      %p155 = por %p153, %p154
      %p156 = scmp.ne.s32.totalorder %s148, %s150
      %p157 = scmp.eq.s32.totalorder %s44, 1
      %p158 = por %p156, %p157
      %p159 = scmp.ne.s32.totalorder %s150, %s151
      %p160 = scmp.eq.s32.totalorder %s44, 0
      %p161 = por %p159, %p160
      %p162 = scmp.ne.s32.totalorder %s150, %s151
      %p163 = scmp.eq.s32.totalorder %s45, 1
      %p164 = por %p162, %p163
      %p166 = scmp.ne.s32.totalorder %s151, %s165
      %p167 = scmp.eq.s32.totalorder %s45, 0
      %p168 = por %p166, %p167
      %s170 = sadd.s32 %s169, 1
      %p173 = scmp.eq.s32.totalorder %s39, 1
      %p174 = scmp.ne.s32.totalorder %s169, %s171
      %p175 = scmp.eq.s32.totalorder %s39, 0
      %p176 = por %p174, %p175
      %p177 = scmp.ne.s32.totalorder %s169, %s171
      %p178 = scmp.eq.s32.totalorder %s44, 1
      %p179 = por %p177, %p178
      %p180 = scmp.ne.s32.totalorder %s171, %s172
      %p181 = scmp.eq.s32.totalorder %s44, 0
      %p182 = por %p180, %p181
      %p183 = scmp.ne.s32.totalorder %s171, %s172
      %p184 = scmp.eq.s32.totalorder %s45, 1
      %p185 = por %p183, %p184
      %p187 = scmp.ne.s32.totalorder %s172, %s186
      %p188 = scmp.eq.s32.totalorder %s45, 0
      %p189 = por %p187, %p188
      %s191 = sadd.s32 %s190, 1
      %p194 = scmp.eq.s32.totalorder %s39, 1
      %p195 = scmp.ne.s32.totalorder %s190, %s192
      %p196 = scmp.eq.s32.totalorder %s39, 0
      %p197 = por %p195, %p196
      %p198 = scmp.ne.s32.totalorder %s190, %s192
      %p199 = scmp.eq.s32.totalorder %s44, 1
      %p200 = por %p198, %p199
      %p201 = scmp.ne.s32.totalorder %s192, %s193
      %p202 = scmp.eq.s32.totalorder %s44, 0
      %p203 = por %p201, %p202
      %p204 = scmp.ne.s32.totalorder %s192, %s193
      %p205 = scmp.eq.s32.totalorder %s45, 1
      %p206 = por %p204, %p205
      %p208 = scmp.ne.s32.totalorder %s193, %s207
      %p209 = scmp.eq.s32.totalorder %s45, 0
      %p210 = por %p208, %p209
      %s212 = sadd.s32 %s211, 1
      %p215 = scmp.eq.s32.totalorder %s39, 1
      %p216 = scmp.ne.s32.totalorder %s211, %s213
      %p217 = scmp.eq.s32.totalorder %s39, 0
      %p218 = por %p216, %p217
      %p219 = scmp.ne.s32.totalorder %s211, %s213
      %p220 = scmp.eq.s32.totalorder %s44, 1
      %p221 = por %p219, %p220
      %p222 = scmp.ne.s32.totalorder %s213, %s214
      %p223 = scmp.eq.s32.totalorder %s44, 0
      %p224 = por %p222, %p223
      %p225 = scmp.ne.s32.totalorder %s213, %s214
      %p226 = scmp.eq.s32.totalorder %s45, 1
      %p227 = por %p225, %p226
      %p229 = scmp.ne.s32.totalorder %s214, %s228
      %p230 = scmp.eq.s32.totalorder %s45, 0
      %p231 = por %p229, %p230
      %s233 = sadd.s32 %s232, 1
      %p236 = scmp.eq.s32.totalorder %s39, 1
      %p237 = scmp.ne.s32.totalorder %s232, %s234
      %p238 = scmp.eq.s32.totalorder %s39, 0
      %p239 = por %p237, %p238
      %p240 = scmp.ne.s32.totalorder %s232, %s234
      %p241 = scmp.eq.s32.totalorder %s44, 1
      %p242 = por %p240, %p241
      %p243 = scmp.ne.s32.totalorder %s234, %s235
      %p244 = scmp.eq.s32.totalorder %s44, 0
      %p245 = por %p243, %p244
      %p246 = scmp.ne.s32.totalorder %s234, %s235
      %p247 = scmp.eq.s32.totalorder %s45, 1
      %p248 = por %p246, %p247
      %p250 = scmp.ne.s32.totalorder %s235, %s249
      %p251 = scmp.eq.s32.totalorder %s45, 0
      %p252 = por %p250, %p251
      %s254 = sadd.s32 %s253, 1
      %p257 = scmp.eq.s32.totalorder %s39, 1
      %p258 = scmp.ne.s32.totalorder %s253, %s255
      %p259 = scmp.eq.s32.totalorder %s39, 0
      %p260 = por %p258, %p259
      %p261 = scmp.ne.s32.totalorder %s253, %s255
      %p262 = scmp.eq.s32.totalorder %s44, 1
      %p263 = por %p261, %p262
      %p264 = scmp.ne.s32.totalorder %s255, %s256
      %p265 = scmp.eq.s32.totalorder %s44, 0
      %p266 = por %p264, %p265
      %p267 = scmp.ne.s32.totalorder %s255, %s256
      %p268 = scmp.eq.s32.totalorder %s45, 1
      %p269 = por %p267, %p268
      %p271 = scmp.ne.s32.totalorder %s256, %s270
      %p272 = scmp.eq.s32.totalorder %s45, 0
      %p273 = por %p271, %p272
      %s275 = sadd.s32 %s274, 1
      %p278 = scmp.eq.s32.totalorder %s39, 1
      %p279 = scmp.ne.s32.totalorder %s274, %s276
      %p280 = scmp.eq.s32.totalorder %s39, 0
      %p281 = por %p279, %p280
      %p282 = scmp.ne.s32.totalorder %s274, %s276
      %p283 = scmp.eq.s32.totalorder %s44, 1
      %p284 = por %p282, %p283
      %p285 = scmp.ne.s32.totalorder %s276, %s277
      %p286 = scmp.eq.s32.totalorder %s44, 0
      %p287 = por %p285, %p286
      %p288 = scmp.ne.s32.totalorder %s276, %s277
      %p289 = scmp.eq.s32.totalorder %s45, 1
      %p290 = por %p288, %p289
      %p292 = scmp.ne.s32.totalorder %s277, %s291
      %p293 = scmp.eq.s32.totalorder %s45, 0
      %p294 = por %p292, %p293
      %s296 = sadd.s32 %s295, 1
      %p299 = scmp.eq.s32.totalorder %s39, 1
      %p300 = scmp.ne.s32.totalorder %s295, %s297
      %p301 = scmp.eq.s32.totalorder %s39, 0
      %p302 = por %p300, %p301
      %p303 = scmp.ne.s32.totalorder %s295, %s297
      %p304 = scmp.eq.s32.totalorder %s44, 1
      %p305 = por %p303, %p304
      %p306 = scmp.ne.s32.totalorder %s297, %s298
      %p307 = scmp.eq.s32.totalorder %s44, 0
      %p308 = por %p306, %p307
      %p309 = scmp.ne.s32.totalorder %s297, %s298
      %p310 = scmp.eq.s32.totalorder %s45, 1
      %p311 = por %p309, %p310
      %p313 = scmp.ne.s32.totalorder %s298, %s312
      %p314 = scmp.eq.s32.totalorder %s45, 0
      %p315 = por %p313, %p314
      %s317 = sadd.s32 %s316, 1
      %p320 = scmp.eq.s32.totalorder %s39, 1
      %p321 = scmp.ne.s32.totalorder %s316, %s318
      %p322 = scmp.eq.s32.totalorder %s39, 0
      %p323 = por %p321, %p322
      %p324 = scmp.ne.s32.totalorder %s316, %s318
      %p325 = scmp.eq.s32.totalorder %s44, 1
      %p326 = por %p324, %p325
      %p327 = scmp.ne.s32.totalorder %s318, %s319
      %p328 = scmp.eq.s32.totalorder %s44, 0
      %p329 = por %p327, %p328
      %p330 = scmp.ne.s32.totalorder %s318, %s319
      %p331 = scmp.eq.s32.totalorder %s45, 1
      %p332 = por %p330, %p331
      %p334 = scmp.ne.s32.totalorder %s319, %s333
      %p335 = scmp.eq.s32.totalorder %s45, 0
      %p336 = por %p334, %p335
      %s338 = sadd.s32 %s337, 1
      %p341 = scmp.eq.s32.totalorder %s39, 1
      %p342 = scmp.ne.s32.totalorder %s337, %s339
      %p343 = scmp.eq.s32.totalorder %s39, 0
      %p344 = por %p342, %p343
      %p345 = scmp.ne.s32.totalorder %s337, %s339
      %p346 = scmp.eq.s32.totalorder %s44, 1
      %p347 = por %p345, %p346
      %p348 = scmp.ne.s32.totalorder %s339, %s340
      %p349 = scmp.eq.s32.totalorder %s44, 0
      %p350 = por %p348, %p349
      %p351 = scmp.ne.s32.totalorder %s339, %s340
      %p352 = scmp.eq.s32.totalorder %s45, 1
      %p353 = por %p351, %p352
      %p355 = scmp.ne.s32.totalorder %s340, %s354
      %p356 = scmp.eq.s32.totalorder %s45, 0
      %p357 = por %p355, %p356
      %s359 = sadd.s32 %s358, 1
      %p362 = scmp.eq.s32.totalorder %s39, 1
      %p363 = scmp.ne.s32.totalorder %s358, %s360
      %p364 = scmp.eq.s32.totalorder %s39, 0
      %p365 = por %p363, %p364
      %p366 = scmp.ne.s32.totalorder %s358, %s360
      %p367 = scmp.eq.s32.totalorder %s44, 1
      %p368 = por %p366, %p367
      %p369 = scmp.ne.s32.totalorder %s360, %s361
      %p370 = scmp.eq.s32.totalorder %s44, 0
      %p371 = por %p369, %p370
      %p372 = scmp.ne.s32.totalorder %s360, %s361
      %p373 = scmp.eq.s32.totalorder %s45, 1
      %p374 = por %p372, %p373
      %p376 = scmp.ne.s32.totalorder %s361, %s375
      %p377 = scmp.eq.s32.totalorder %s45, 0
      %p378 = por %p376, %p377
      %s380 = sadd.s32 %s379, 1
      %p383 = scmp.eq.s32.totalorder %s39, 1
      %p384 = scmp.ne.s32.totalorder %s379, %s381
      %p385 = scmp.eq.s32.totalorder %s39, 0
      %p386 = por %p384, %p385
      %p387 = scmp.ne.s32.totalorder %s379, %s381
      %p388 = scmp.eq.s32.totalorder %s44, 1
      %p389 = por %p387, %p388
      %p390 = scmp.ne.s32.totalorder %s381, %s382
      %p391 = scmp.eq.s32.totalorder %s44, 0
      %p392 = por %p390, %p391
      %p393 = scmp.ne.s32.totalorder %s381, %s382
      %p394 = scmp.eq.s32.totalorder %s45, 1
      %p395 = por %p393, %p394
      %p397 = scmp.ne.s32.totalorder %s382, %s396
      %p398 = scmp.eq.s32.totalorder %s45, 0
      %p399 = por %p397, %p398
      %s401 = sadd.s32 %s400, 1
      %p404 = scmp.eq.s32.totalorder %s39, 1
      %p405 = scmp.ne.s32.totalorder %s400, %s402
      %p406 = scmp.eq.s32.totalorder %s39, 0
      %p407 = por %p405, %p406
      %p408 = scmp.ne.s32.totalorder %s400, %s402
      %p409 = scmp.eq.s32.totalorder %s44, 1
      %p410 = por %p408, %p409
      %p411 = scmp.ne.s32.totalorder %s402, %s403
      %p412 = scmp.eq.s32.totalorder %s44, 0
      %p413 = por %p411, %p412
      %p414 = scmp.ne.s32.totalorder %s402, %s403
      %p415 = scmp.eq.s32.totalorder %s45, 1
      %p416 = por %p414, %p415
      %p418 = scmp.ne.s32.totalorder %s403, %s417
      %p419 = scmp.eq.s32.totalorder %s45, 0
      %p420 = por %p418, %p419
      %s421 = ssub.s32 %s46, %s58
      %s422 = ssub.s32 %s47, %s54
      %s423 = sor.u32 %s421, %s422
      %p424 = scmp.eq.s32.totalorder %s423, 0
      %s426 = sadd.s32 %s425, 1
      %s427 = scalar_select %p424, %s425, %s426
      %p430 = pneg %p424
      %p431 = scmp.eq.s32.totalorder %s39, 1
      %p432 = por %p430, %p431
      %p433 = scmp.ne.s32.totalorder %s425, %s428
      %p434 = scmp.eq.s32.totalorder %s39, 0
      %p435 = por %p433, %p434
      %p436 = scmp.ne.s32.totalorder %s425, %s428
      %p437 = scmp.eq.s32.totalorder %s44, 1
      %p438 = por %p436, %p437
      %p439 = scmp.ne.s32.totalorder %s428, %s429
      %p440 = scmp.eq.s32.totalorder %s44, 0
      %p441 = por %p439, %p440
      %p442 = scmp.ne.s32.totalorder %s428, %s429
      %p443 = scmp.eq.s32.totalorder %s45, 1
      %p444 = por %p442, %p443
      %p446 = scmp.ne.s32.totalorder %s429, %s445
      %p447 = scmp.eq.s32.totalorder %s45, 0
      %p448 = por %p446, %p447
      %p449 = scmp.le.s32.totalorder 1, %s39
      %p450 = scmp.lt.s32.totalorder %s39, 3
      %p451 = pnand %p449, %p450
      %p452 = pneg %p451
      // Predicated region
      $region9: #{tpu_custom_call.1} parent=5 // pred_check
        _
      $region10: #{tpu_custom_call.1} parent=5 // pred_check_branch
        %454 = sbr.rel (%p451) target = $region12
      $region11: #{tpu_custom_call.1} parent=5 // pred_region
        %s455 = ssub.s32 %s39, 1
        // Predicated region
        $region13: #{tpu_custom_call.1} parent=11 // pred_check
          %p456 = pneg %p98
        $region14: #{tpu_custom_call.1} parent=11 // pred_check_branch
          %458 = sbr.rel (%p456) target = $region16
        $region15: #{tpu_custom_call.1} parent=11 // pred_region
          _
        $region16: #{tpu_custom_call.1} parent=11 // pred_fallthru
          _
        // Predicated region
        $region17: #{tpu_custom_call.1} parent=11 // pred_check
          %p459 = pneg %p119
        $region18: #{tpu_custom_call.1} parent=11 // pred_check_branch
          %461 = sbr.rel (%p459) target = $region20
        $region19: #{tpu_custom_call.1} parent=11 // pred_region
          _
        $region20: #{tpu_custom_call.1} parent=11 // pred_fallthru
          _
        // Predicated region
        $region21: #{tpu_custom_call.1} parent=11 // pred_check
          %p462 = pneg %p140
        $region22: #{tpu_custom_call.1} parent=11 // pred_check_branch
          %464 = sbr.rel (%p462) target = $region24
        $region23: #{tpu_custom_call.1} parent=11 // pred_region
          _
        $region24: #{tpu_custom_call.1} parent=11 // pred_fallthru
          _
        // Predicated region
        $region25: #{tpu_custom_call.1} parent=11 // pred_check
          %p465 = pneg %p161
        $region26: #{tpu_custom_call.1} parent=11 // pred_check_branch
          %467 = sbr.rel (%p465) target = $region28
        $region27: #{tpu_custom_call.1} parent=11 // pred_region
          _
        $region28: #{tpu_custom_call.1} parent=11 // pred_fallthru
          _
        // Predicated region
        $region29: #{tpu_custom_call.1} parent=11 // pred_check
          %p468 = pneg %p182
        $region30: #{tpu_custom_call.1} parent=11 // pred_check_branch
          %470 = sbr.rel (%p468) target = $region32
        $region31: #{tpu_custom_call.1} parent=11 // pred_region
          _
        $region32: #{tpu_custom_call.1} parent=11 // pred_fallthru
          _
        // Predicated region
        $region33: #{tpu_custom_call.1} parent=11 // pred_check
          %p471 = pneg %p203
        $region34: #{tpu_custom_call.1} parent=11 // pred_check_branch
          %473 = sbr.rel (%p471) target = $region36
        $region35: #{tpu_custom_call.1} parent=11 // pred_region
          _
        $region36: #{tpu_custom_call.1} parent=11 // pred_fallthru
          _
        // Predicated region
        $region37: #{tpu_custom_call.1} parent=11 // pred_check
          %p474 = pneg %p224
        $region38: #{tpu_custom_call.1} parent=11 // pred_check_branch
          %476 = sbr.rel (%p474) target = $region40
        $region39: #{tpu_custom_call.1} parent=11 // pred_region
          %478 = vsyncadd [#allocation10], 0
          %s479 = sshll.u32 %s8, 4
          %s480 = int_to_ptr.hbm [resolvable:$true] %s479
          %s481 = sshll.u32 [#allocation9], 4
          %s482 = int_to_ptr.vmem [resolvable:$true] %s481
          %487 = dma.hbm_to_vmem [thread:$0]  %s480, 256, %s482, [#allocation10], 64, 64, 4
        $region40: #{tpu_custom_call.1} parent=11 // pred_fallthru
          _
        // Predicated region
        $region41: #{tpu_custom_call.1} parent=11 // pred_check
          %p488 = pneg %p245
        $region42: #{tpu_custom_call.1} parent=11 // pred_check_branch
          %490 = sbr.rel (%p488) target = $region44
        $region43: #{tpu_custom_call.1} parent=11 // pred_region
          _
        $region44: #{tpu_custom_call.1} parent=11 // pred_fallthru
          _
        // Predicated region
        $region45: #{tpu_custom_call.1} parent=11 // pred_check
          %p491 = pneg %p266
        $region46: #{tpu_custom_call.1} parent=11 // pred_check_branch
          %493 = sbr.rel (%p491) target = $region48
        $region47: #{tpu_custom_call.1} parent=11 // pred_region
          _
        $region48: #{tpu_custom_call.1} parent=11 // pred_fallthru
          _
        // Predicated region
        $region49: #{tpu_custom_call.1} parent=11 // pred_check
          %p494 = pneg %p287
        $region50: #{tpu_custom_call.1} parent=11 // pred_check_branch
          %496 = sbr.rel (%p494) target = $region52
        $region51: #{tpu_custom_call.1} parent=11 // pred_region
          _
        $region52: #{tpu_custom_call.1} parent=11 // pred_fallthru
          _
        // Predicated region
        $region53: #{tpu_custom_call.1} parent=11 // pred_check
          %p497 = pneg %p308
        $region54: #{tpu_custom_call.1} parent=11 // pred_check_branch
          %499 = sbr.rel (%p497) target = $region56
        $region55: #{tpu_custom_call.1} parent=11 // pred_region
          %501 = vsyncadd [#allocation10], 0
          %s502 = sshll.u32 %s12, 4
          %s503 = int_to_ptr.hbm [resolvable:$true] %s502
          %s504 = sshll.u32 [#allocation11], 4
          %s505 = int_to_ptr.vmem [resolvable:$true] %s504
          %510 = dma.hbm_to_vmem [thread:$0]  %s503, 256, %s505, [#allocation10], 64, 64, 4
        $region56: #{tpu_custom_call.1} parent=11 // pred_fallthru
          _
        // Predicated region
        $region57: #{tpu_custom_call.1} parent=11 // pred_check
          %p511 = pneg %p329
        $region58: #{tpu_custom_call.1} parent=11 // pred_check_branch
          %513 = sbr.rel (%p511) target = $region60
        $region59: #{tpu_custom_call.1} parent=11 // pred_region
          _
        $region60: #{tpu_custom_call.1} parent=11 // pred_fallthru
          _
        // Predicated region
        $region61: #{tpu_custom_call.1} parent=11 // pred_check
          %p514 = pneg %p350
        $region62: #{tpu_custom_call.1} parent=11 // pred_check_branch
          %516 = sbr.rel (%p514) target = $region64
        $region63: #{tpu_custom_call.1} parent=11 // pred_region
          _
        $region64: #{tpu_custom_call.1} parent=11 // pred_fallthru
          _
        // Predicated region
        $region65: #{tpu_custom_call.1} parent=11 // pred_check
          %p517 = pneg %p371
        $region66: #{tpu_custom_call.1} parent=11 // pred_check_branch
          %519 = sbr.rel (%p517) target = $region68
        $region67: #{tpu_custom_call.1} parent=11 // pred_region
          _
        $region68: #{tpu_custom_call.1} parent=11 // pred_fallthru
          _
        // Predicated region
        $region69: #{tpu_custom_call.1} parent=11 // pred_check
          %p520 = pneg %p392
        $region70: #{tpu_custom_call.1} parent=11 // pred_check_branch
          %522 = sbr.rel (%p520) target = $region72
        $region71: #{tpu_custom_call.1} parent=11 // pred_region
          _
        $region72: #{tpu_custom_call.1} parent=11 // pred_fallthru
          _
        // Predicated region
        $region73: #{tpu_custom_call.1} parent=11 // pred_check
          %p523 = pneg %p413
        $region74: #{tpu_custom_call.1} parent=11 // pred_check_branch
          %525 = sbr.rel (%p523) target = $region76
        $region75: #{tpu_custom_call.1} parent=11 // pred_region
          _
        $region76: #{tpu_custom_call.1} parent=11 // pred_fallthru
          _
      $region12: #{tpu_custom_call.1} parent=5 // pred_fallthru
        _
      %p526 = scmp.lt.s32.totalorder %s39, 2
      // Predicated region
      $region77: #{tpu_custom_call.1} parent=5 // pred_check
        %p527 = pneg %p526
      $region78: #{tpu_custom_call.1} parent=5 // pred_check_branch
        %529 = sbr.rel (%p527) target = $region80
      $region79: #{tpu_custom_call.1} parent=5 // pred_region
        // Predicated region
        $region81: #{tpu_custom_call.1} parent=79 // pred_check
          %p530 = pneg %p71
        $region82: #{tpu_custom_call.1} parent=79 // pred_check_branch
          %532 = sbr.rel (%p530) target = $region84
        $region83: #{tpu_custom_call.1} parent=79 // pred_region
          %s533 = sand.u32 %s61, 1
          %s534 = scalar_lea.sflag [#allocation7], %s533
          %s535 = sand.u32 %s61, 1
          %s536 = smul.addr %s535, 4
          %s537 = scalar_lea.vmem [#allocation6], %s536
          %539 = vsyncadd %s534, 0
          %s540 = smul.addr %s46, 4
          %s541 = scalar_lea.hbm %s1, %s540
          %s543 = sshll.u32 %s541, 4
          %s544 = int_to_ptr.hbm [resolvable:$true] %s543
          %s545 = sshll.u32 %s537, 4
          %s546 = int_to_ptr.vmem [resolvable:$true] %s545
          %548 = dma.hbm_to_vmem [thread:$0]  %s544, 64, %s546, %s534
        $region84: #{tpu_custom_call.1} parent=79 // pred_fallthru
          _
      $region80: #{tpu_custom_call.1} parent=5 // pred_fallthru
        _
      %p549 = scmp.le.s32.totalorder 1, %s39
      %p550 = scmp.lt.s32.totalorder %s39, 3
      %p551 = pnand %p549, %p550
      %p552 = pneg %p551
      // Predicated region
      $region85: #{tpu_custom_call.1} parent=5 // pred_check
        _
      $region86: #{tpu_custom_call.1} parent=5 // pred_check_branch
        %554 = sbr.rel (%p551) target = $region88
      $region87: #{tpu_custom_call.1} parent=5 // pred_region
        %s555 = ssub.s32 %s39, 1
        %s556 = sand.u32 %s64, 1
        %s557 = scalar_lea.sflag [#allocation7], %s556
        %s558 = sand.u32 %s64, 1
        %s559 = smul.addr %s558, 4
        %s560 = scalar_lea.vmem [#allocation6], %s559
        // Predicated region
        $region89: #{tpu_custom_call.1} parent=87 // pred_check
          %p561 = pneg %p77
        $region90: #{tpu_custom_call.1} parent=87 // pred_check_branch
          %563 = sbr.rel (%p561) target = $region92
        $region91: #{tpu_custom_call.1} parent=87 // pred_region
          %565 = dma.done %s557, 64
        $region92: #{tpu_custom_call.1} parent=87 // pred_fallthru
          _
        // Predicated region
        $region93: #{tpu_custom_call.1} parent=87 // pred_check
          %p566 = pneg %p224
        $region94: #{tpu_custom_call.1} parent=87 // pred_check_branch
          %568 = sbr.rel (%p566) target = $region96
        $region95: #{tpu_custom_call.1} parent=87 // pred_region
          %570 = dma.done [#allocation10], 256
        $region96: #{tpu_custom_call.1} parent=87 // pred_fallthru
          _
        // Predicated region
        $region97: #{tpu_custom_call.1} parent=87 // pred_check
          %p571 = pneg %p308
        $region98: #{tpu_custom_call.1} parent=87 // pred_check_branch
          %573 = sbr.rel (%p571) target = $region100
        $region99: #{tpu_custom_call.1} parent=87 // pred_region
          %575 = dma.done [#allocation10], 256
        $region100: #{tpu_custom_call.1} parent=87 // pred_fallthru
          _
        %s576 = sand.u32 %s64, 1
        %s577 = scalar_lea.sflag [#allocation7], %s576
        %s578 = sand.u32 %s64, 1
        %s579 = smul.addr %s578, 4
        %s580 = scalar_lea.vmem [#allocation6], %s579
        %p581 = pneg %p77
        %p582 = pneg %p74
        %p583 = pneg %p98
        %p584 = pneg %p95
        %p585 = pneg %p119
        %p586 = pneg %p116
        %p587 = pneg %p140
        %p588 = pneg %p137
        %p589 = pneg %p161
        %p590 = pneg %p158
        %p591 = pneg %p182
        %p592 = pneg %p179
        %p593 = pneg %p203
        %p594 = pneg %p200
        %p595 = pneg %p224
        %p596 = pneg %p221
        %p597 = pneg %p245
        %p598 = pneg %p242
        %p599 = pneg %p266
        %p600 = pneg %p263
        %p601 = pneg %p287
        %p602 = pneg %p284
        %p603 = pneg %p308
        %p604 = pneg %p305
        %p605 = pneg %p329
        %p606 = pneg %p326
        %p607 = pneg %p350
        %p608 = pneg %p347
        %p609 = pneg %p371
        %p610 = pneg %p368
        %p611 = pneg %p392
        %p612 = pneg %p389
        %p613 = pneg %p413
        %p614 = pneg %p410
        %p615 = pneg %p441
        %p616 = pneg %p438
        %s617 = sand.u32 %s428, 1
        %s618 = scalar_lea.sflag [#allocation8], %s617
        %s619 = sand.u32 %s428, 1
        %s620 = smul.addr %s619, 4
        %s621 = scalar_lea.vmem [#allocation12], %s620
        %p623 = scmp.eq.s32.totalorder %s49, 0
        // Predicated region
        $region101: #{tpu_custom_call.1} parent=87 // pred_check
          %p624 = pneg %p623
        $region102: #{tpu_custom_call.1} parent=87 // pred_check_branch
          %626 = sbr.rel (%p624) target = $region104
        $region103: #{tpu_custom_call.1} parent=87 // pred_region
          %v627 = vld [vmem:[%s560] sm:$0xf]
          %v628 = vld [vmem:[%s4] sm:$0xf]
          %v629 = vld [vmem:[%s4 + $0x4] sm:$0xf]
          %v630 = vld [vmem:[%s4 + $0x8] sm:$0xf]
          %v631 = vld [vmem:[%s4 + $0xc] sm:$0xf]
          %v632 = vld [vmem:[%s5] sm:$0x1]
          %v634 = vperm.slane %v632, 0
          %v640 = vunpack.c.l.b16 %v628
          %v641 = vunpack.c.l.b16 %v629
          %v642 = vunpack.c.l.b16 %v630
          %v643 = vunpack.c.l.b16 %v631
          %v644 = vpack.c.b16 %v641, %v640
          %v645 = vpack.c.b16 %v643, %v642
          %vm648 = vcmask 261120
          %v650 = vsel %vm648, %v627, 0
          %652 = vmatpush.bf16.msra.mxu0 0
          %653 = vmatpush.bf16.msra.mxu0 0
          %654 = vmatpush.bf16.msra.mxu0 0
          %655 = vmatpush.bf16.msra.mxu0 0
          %656 = vmatpush.bf16.msra.mxu0 0
          %657 = vmatpush.bf16.msra.mxu0 0
          %658 = vmatpush.bf16.msra.mxu0 %v645
          %659 = vmatpush.bf16.msra.mxu0 %v644
          %660 = vmatmul.bf16.gmra.mxu0 %v650
          %v661 = vpop.f32.mrf.mxu0
          %v662 = vadd.f32 %v634, %v661
          %v663 = vpop.f32.mrf.mxu0
          %664 = vdwg.mxu0
          %v665 = vld [vmem:[%s6] sm:$0xf]
          %v666 = vld [vmem:[%s6 + $0x4] sm:$0xf]
          %v667 = vld [vmem:[%s6 + $0x8] sm:$0xf]
          %v668 = vld [vmem:[%s6 + $0xc] sm:$0xf]
          %v669 = vld [vmem:[%s7] sm:$0x1]
          %v671 = vperm.slane %v669, 0
          %v677 = vunpack.c.l.b16 %v665
          %v678 = vunpack.c.l.b16 %v666
          %v679 = vunpack.c.l.b16 %v667
          %v680 = vunpack.c.l.b16 %v668
          %v681 = vpack.c.b16 %v678, %v677
          %v682 = vpack.c.b16 %v680, %v679
          %685 = vmatpush.bf16.msra.mxu0 0
          %686 = vmatpush.bf16.msra.mxu0 0
          %687 = vmatpush.bf16.msra.mxu0 0
          %688 = vmatpush.bf16.msra.mxu0 0
          %689 = vmatpush.bf16.msra.mxu0 0
          %690 = vmatpush.bf16.msra.mxu0 0
          %691 = vmatpush.bf16.msra.mxu0 %v682
          %692 = vmatpush.bf16.msra.mxu0 %v681
          %693 = vmatmul.bf16.gmra.mxu0 %v650
          %v694 = vpop.f32.mrf.mxu0
          %v695 = vadd.f32 %v671, %v694
          %v696 = vpop.f32.mrf.mxu0
          %697 = vdwg.mxu0
          %v698 = vpack.c.bf16 %v662, %v662
          %700 = vrot.lane.b32.xlu0 %v698, 120
          %v701 = vpop.permute.xlu0 %700
          %702 = vrot.lane.b32.xlu0 %v698, 112
          %v703 = vpop.permute.xlu0 %702
          %704 = vrot.lane.b32.xlu0 %v698, 104
          %v705 = vpop.permute.xlu0 %704
          %v708 = vpack.i.b16 %v701, %v698
          %v709 = vshrl.u32 %v698, 16
          %v710 = vshrl.u32 %v701, 16
          %v711 = vpack.i.b16 %v710, %v709
          %v714 = vpack.i.b16 %v705, %v703
          %v715 = vshrl.u32 %v703, 16
          %v716 = vshrl.u32 %v705, 16
          %v717 = vpack.i.b16 %v716, %v715
          %v720 = vunpack.c.l.s4 1983009808
          %v721 = vunpack.c.0.s8 %v720
          %v722 = vperm.slane %v708, %v721
          %v725 = vunpack.c.l.s4 1983009808
          %v726 = vunpack.c.0.s8 %v725
          %v727 = vperm.slane %v714, %v726
          %v728 = vrot.slane %v727, 4
          %vm729 = vcmask 1047556
          %v730 = vsel %vm729, %v728, %v722
          %v731 = vrot.slane %v722, 4
          %v732 = vsel %vm729, %v727, %v731
          %v734 = vunpack.c.l.s4 1934713408
          %v735 = vunpack.c.0.s8 %v734
          %v736 = vperm.slane %v730, %v735
          %v738 = vunpack.c.l.s4 1934713408
          %v739 = vunpack.c.0.s8 %v738
          %v740 = vperm.slane %v732, %v739
          %v741 = vrot.slane %v736, 4
          %v742 = vsel %vm729, 0, %v741
          %v743 = vrot.slane %v740, 4
          %v744 = vsel %vm729, 0, %v743
          %v747 = vunpack.c.l.s4 1983009808
          %v748 = vunpack.c.0.s8 %v747
          %v749 = vperm.slane %v711, %v748
          %v752 = vunpack.c.l.s4 1983009808
          %v753 = vunpack.c.0.s8 %v752
          %v754 = vperm.slane %v717, %v753
          %v755 = vrot.slane %v754, 4
          %v756 = vsel %vm729, %v755, %v749
          %v757 = vrot.slane %v749, 4
          %v758 = vsel %vm729, %v754, %v757
          %v760 = vunpack.c.l.s4 1934713408
          %v761 = vunpack.c.0.s8 %v760
          %v762 = vperm.slane %v756, %v761
          %v764 = vunpack.c.l.s4 1934713408
          %v765 = vunpack.c.0.s8 %v764
          %v766 = vperm.slane %v758, %v765
          %v767 = vrot.slane %v762, 4
          %v768 = vsel %vm729, 0, %v767
          %v769 = vrot.slane %v766, 4
          %v770 = vsel %vm729, 0, %v769
          %v771 = vsel %vm729, %v743, %v736
          %v773 = vunpack.c.l.s4 1983009808
          %v774 = vunpack.c.0.s8 %v773
          %v775 = vperm.slane %v771, %v774
          %v776 = vrot.slane %v744, 4
          %v777 = vsel %vm729, %v776, %v742
          %v779 = vunpack.c.l.s4 1983009808
          %v780 = vunpack.c.0.s8 %v779
          %v781 = vperm.slane %v777, %v780
          %v782 = vrot.slane %v781, 4
          %v783 = vsel %vm729, %v782, %v775
          %v785 = vunpack.c.l.s4 1934713408
          %v786 = vunpack.c.0.s8 %v785
          %v787 = vperm.slane %v783, %v786
          %v788 = vrot.slane %v787, 4
          %v789 = vsel %vm729, 0, %v788
          %v790 = vsel %vm729, %v769, %v762
          %v792 = vunpack.c.l.s4 1983009808
          %v793 = vunpack.c.0.s8 %v792
          %v794 = vperm.slane %v790, %v793
          %v795 = vrot.slane %v770, 4
          %v796 = vsel %vm729, %v795, %v768
          %v798 = vunpack.c.l.s4 1983009808
          %v799 = vunpack.c.0.s8 %v798
          %v800 = vperm.slane %v796, %v799
          %v801 = vrot.slane %v800, 4
          %v802 = vsel %vm729, %v801, %v794
          %v804 = vunpack.c.l.s4 1934713408
          %v805 = vunpack.c.0.s8 %v804
          %v806 = vperm.slane %v802, %v805
          %v807 = vrot.slane %v806, 4
          %v808 = vsel %vm729, 0, %v807
          %v811 = vpack.i.b16 %v806, %v787
          %v813 = vshrl.u32 %v787, 16
          %v814 = vshrl.u32 %v806, 16
          %v815 = vpack.i.b16 %v814, %v813
          %v819 = vpack.i.b16 %v808, %v789
          %v821 = vshrl.u32 %v789, 16
          %v822 = vshrl.u32 %v808, 16
          %v823 = vpack.i.b16 %v822, %v821
          %vm825 = vcmask 60416
          %826 = vst.msk [vmem:[#allocation2] sm:$0xf] %vm825, %v811
          %827 = vst.msk [vmem:[#allocation2 + $0x4] sm:$0xf] %vm825, %v815
          %828 = vst.msk [vmem:[#allocation2 + $0x8] sm:$0xf] %vm825, %v819
          %829 = vst.msk [vmem:[#allocation2 + $0xc] sm:$0xf] %vm825, %v823
          %v830 = vpack.c.bf16 %v695, %v695
          %832 = vrot.lane.b32.xlu0 %v830, 120
          %v833 = vpop.permute.xlu0 %832
          %834 = vrot.lane.b32.xlu0 %v830, 112
          %v835 = vpop.permute.xlu0 %834
          %836 = vrot.lane.b32.xlu0 %v830, 104
          %v837 = vpop.permute.xlu0 %836
          %v840 = vpack.i.b16 %v833, %v830
          %v841 = vshrl.u32 %v830, 16
          %v842 = vshrl.u32 %v833, 16
          %v843 = vpack.i.b16 %v842, %v841
          %v846 = vpack.i.b16 %v837, %v835
          %v847 = vshrl.u32 %v835, 16
          %v848 = vshrl.u32 %v837, 16
          %v849 = vpack.i.b16 %v848, %v847
          %v852 = vunpack.c.l.s4 1983009808
          %v853 = vunpack.c.0.s8 %v852
          %v854 = vperm.slane %v840, %v853
          %v857 = vunpack.c.l.s4 1983009808
          %v858 = vunpack.c.0.s8 %v857
          %v859 = vperm.slane %v846, %v858
          %v860 = vrot.slane %v859, 4
          %v861 = vsel %vm729, %v860, %v854
          %v862 = vrot.slane %v854, 4
          %v863 = vsel %vm729, %v859, %v862
          %v865 = vunpack.c.l.s4 1934713408
          %v866 = vunpack.c.0.s8 %v865
          %v867 = vperm.slane %v861, %v866
          %v869 = vunpack.c.l.s4 1934713408
          %v870 = vunpack.c.0.s8 %v869
          %v871 = vperm.slane %v863, %v870
          %v872 = vrot.slane %v867, 4
          %v873 = vsel %vm729, 0, %v872
          %v874 = vrot.slane %v871, 4
          %v875 = vsel %vm729, 0, %v874
          %v878 = vunpack.c.l.s4 1983009808
          %v879 = vunpack.c.0.s8 %v878
          %v880 = vperm.slane %v843, %v879
          %v883 = vunpack.c.l.s4 1983009808
          %v884 = vunpack.c.0.s8 %v883
          %v885 = vperm.slane %v849, %v884
          %v886 = vrot.slane %v885, 4
          %v887 = vsel %vm729, %v886, %v880
          %v888 = vrot.slane %v880, 4
          %v889 = vsel %vm729, %v885, %v888
          %v891 = vunpack.c.l.s4 1934713408
          %v892 = vunpack.c.0.s8 %v891
          %v893 = vperm.slane %v887, %v892
          %v895 = vunpack.c.l.s4 1934713408
          %v896 = vunpack.c.0.s8 %v895
          %v897 = vperm.slane %v889, %v896
          %v898 = vrot.slane %v893, 4
          %v899 = vsel %vm729, 0, %v898
          %v900 = vrot.slane %v897, 4
          %v901 = vsel %vm729, 0, %v900
          %v902 = vsel %vm729, %v874, %v867
          %v904 = vunpack.c.l.s4 1983009808
          %v905 = vunpack.c.0.s8 %v904
          %v906 = vperm.slane %v902, %v905
          %v907 = vrot.slane %v875, 4
          %v908 = vsel %vm729, %v907, %v873
          %v910 = vunpack.c.l.s4 1983009808
          %v911 = vunpack.c.0.s8 %v910
          %v912 = vperm.slane %v908, %v911
          %v913 = vrot.slane %v912, 4
          %v914 = vsel %vm729, %v913, %v906
          %v916 = vunpack.c.l.s4 1934713408
          %v917 = vunpack.c.0.s8 %v916
          %v918 = vperm.slane %v914, %v917
          %v919 = vrot.slane %v918, 4
          %v920 = vsel %vm729, 0, %v919
          %v921 = vsel %vm729, %v900, %v893
          %v923 = vunpack.c.l.s4 1983009808
          %v924 = vunpack.c.0.s8 %v923
          %v925 = vperm.slane %v921, %v924
          %v926 = vrot.slane %v901, 4
          %v927 = vsel %vm729, %v926, %v899
          %v929 = vunpack.c.l.s4 1983009808
          %v930 = vunpack.c.0.s8 %v929
          %v931 = vperm.slane %v927, %v930
          %v932 = vrot.slane %v931, 4
          %v933 = vsel %vm729, %v932, %v925
          %v935 = vunpack.c.l.s4 1934713408
          %v936 = vunpack.c.0.s8 %v935
          %v937 = vperm.slane %v933, %v936
          %v938 = vrot.slane %v937, 4
          %v939 = vsel %vm729, 0, %v938
          %v942 = vpack.i.b16 %v937, %v918
          %v944 = vshrl.u32 %v918, 16
          %v945 = vshrl.u32 %v937, 16
          %v946 = vpack.i.b16 %v945, %v944
          %v950 = vpack.i.b16 %v939, %v920
          %v952 = vshrl.u32 %v920, 16
          %v953 = vshrl.u32 %v939, 16
          %v954 = vpack.i.b16 %v953, %v952
          %956 = vst.msk [vmem:[#allocation3] sm:$0xf] %vm825, %v942
          %957 = vst.msk [vmem:[#allocation3 + $0x4] sm:$0xf] %vm825, %v946
          %958 = vst.msk [vmem:[#allocation3 + $0x8] sm:$0xf] %vm825, %v950
          %959 = vst.msk [vmem:[#allocation3 + $0xc] sm:$0xf] %vm825, %v954
        $region104: #{tpu_custom_call.1} parent=87 // pred_fallthru
          _
        %s960 = smul.u32 %s49, 8
        %s961 = sshra.s32 %s960, 3
        %s962 = sand.u32 %s960, 7
        %s963 = smul.addr %s961, 4
        %s964 = scalar_lea.vmem %s560, %s963 [#allocation6]
        %v965 = vld [vmem:[%s964] sm:$0xf]
        %v966 = vld [vmem:[%s2] sm:$0xf]
        %v967 = vld [vmem:[%s2 + $0x4] sm:$0xf]
        %v968 = vld [vmem:[%s2 + $0x8] sm:$0xf]
        %v969 = vld [vmem:[%s2 + $0xc] sm:$0xf]
        %v970 = vld [vmem:[%s3] sm:$0x1]
        %v972 = vperm.slane %v970, 0
        %v978 = vunpack.c.l.b16 %v966
        %v979 = vunpack.c.l.b16 %v967
        %v980 = vunpack.c.l.b16 %v968
        %v981 = vunpack.c.l.b16 %v969
        %v982 = vpack.c.b16 %v979, %v978
        %v983 = vpack.c.b16 %v981, %v980
        %vm986 = vcmask 261120
        %v988 = vsel %vm986, %v965, 0
        %990 = vmatpush.bf16.msra.mxu0 0
        %991 = vmatpush.bf16.msra.mxu0 0
        %992 = vmatpush.bf16.msra.mxu0 0
        %993 = vmatpush.bf16.msra.mxu0 0
        %994 = vmatpush.bf16.msra.mxu0 0
        %995 = vmatpush.bf16.msra.mxu0 0
        %996 = vmatpush.bf16.msra.mxu0 %v983
        %997 = vmatpush.bf16.msra.mxu0 %v982
        %998 = vmatmul.bf16.gmra.mxu0 %v988
        %v999 = vpop.f32.mrf.mxu0
        %v1000 = vadd.f32 %v972, %v999
        %v1001 = vpop.f32.mrf.mxu0
        %1002 = vdwg.mxu0
        %v1003 = vpack.c.bf16 %v1000, %v1000
        %1005 = vrot.lane.b32.xlu0 %v1003, 120
        %v1006 = vpop.permute.xlu0 %1005
        %1007 = vrot.lane.b32.xlu0 %v1003, 112
        %v1008 = vpop.permute.xlu0 %1007
        %1009 = vrot.lane.b32.xlu0 %v1003, 104
        %v1010 = vpop.permute.xlu0 %1009
        %v1013 = vpack.i.b16 %v1006, %v1003
        %v1014 = vshrl.u32 %v1003, 16
        %v1015 = vshrl.u32 %v1006, 16
        %v1016 = vpack.i.b16 %v1015, %v1014
        %v1019 = vpack.i.b16 %v1010, %v1008
        %v1020 = vshrl.u32 %v1008, 16
        %v1021 = vshrl.u32 %v1010, 16
        %v1022 = vpack.i.b16 %v1021, %v1020
        %v1025 = vunpack.c.l.s4 1983009808
        %v1026 = vunpack.c.0.s8 %v1025
        %v1027 = vperm.slane %v1013, %v1026
        %v1030 = vunpack.c.l.s4 1983009808
        %v1031 = vunpack.c.0.s8 %v1030
        %v1032 = vperm.slane %v1019, %v1031
        %v1033 = vrot.slane %v1032, 4
        %vm1034 = vcmask 1047556
        %v1035 = vsel %vm1034, %v1033, %v1027
        %v1036 = vrot.slane %v1027, 4
        %v1037 = vsel %vm1034, %v1032, %v1036
        %v1039 = vunpack.c.l.s4 1934713408
        %v1040 = vunpack.c.0.s8 %v1039
        %v1041 = vperm.slane %v1035, %v1040
        %v1043 = vunpack.c.l.s4 1934713408
        %v1044 = vunpack.c.0.s8 %v1043
        %v1045 = vperm.slane %v1037, %v1044
        %v1046 = vrot.slane %v1041, 4
        %v1047 = vsel %vm1034, 0, %v1046
        %v1048 = vrot.slane %v1045, 4
        %v1049 = vsel %vm1034, 0, %v1048
        %v1052 = vunpack.c.l.s4 1983009808
        %v1053 = vunpack.c.0.s8 %v1052
        %v1054 = vperm.slane %v1016, %v1053
        %v1057 = vunpack.c.l.s4 1983009808
        %v1058 = vunpack.c.0.s8 %v1057
        %v1059 = vperm.slane %v1022, %v1058
        %v1060 = vrot.slane %v1059, 4
        %v1061 = vsel %vm1034, %v1060, %v1054
        %v1062 = vrot.slane %v1054, 4
        %v1063 = vsel %vm1034, %v1059, %v1062
        %v1065 = vunpack.c.l.s4 1934713408
        %v1066 = vunpack.c.0.s8 %v1065
        %v1067 = vperm.slane %v1061, %v1066
        %v1069 = vunpack.c.l.s4 1934713408
        %v1070 = vunpack.c.0.s8 %v1069
        %v1071 = vperm.slane %v1063, %v1070
        %v1072 = vrot.slane %v1067, 4
        %v1073 = vsel %vm1034, 0, %v1072
        %v1074 = vrot.slane %v1071, 4
        %v1075 = vsel %vm1034, 0, %v1074
        %v1076 = vsel %vm1034, %v1048, %v1041
        %v1078 = vunpack.c.l.s4 1983009808
        %v1079 = vunpack.c.0.s8 %v1078
        %v1080 = vperm.slane %v1076, %v1079
        %v1081 = vrot.slane %v1049, 4
        %v1082 = vsel %vm1034, %v1081, %v1047
        %v1084 = vunpack.c.l.s4 1983009808
        %v1085 = vunpack.c.0.s8 %v1084
        %v1086 = vperm.slane %v1082, %v1085
        %v1087 = vrot.slane %v1086, 4
        %v1088 = vsel %vm1034, %v1087, %v1080
        %v1090 = vunpack.c.l.s4 1934713408
        %v1091 = vunpack.c.0.s8 %v1090
        %v1092 = vperm.slane %v1088, %v1091
        %v1093 = vrot.slane %v1092, 4
        %v1094 = vsel %vm1034, 0, %v1093
        %v1095 = vsel %vm1034, %v1074, %v1067
        %v1097 = vunpack.c.l.s4 1983009808
        %v1098 = vunpack.c.0.s8 %v1097
        %v1099 = vperm.slane %v1095, %v1098
        %v1100 = vrot.slane %v1075, 4
        %v1101 = vsel %vm1034, %v1100, %v1073
        %v1103 = vunpack.c.l.s4 1983009808
        %v1104 = vunpack.c.0.s8 %v1103
        %v1105 = vperm.slane %v1101, %v1104
        %v1106 = vrot.slane %v1105, 4
        %v1107 = vsel %vm1034, %v1106, %v1099
        %v1109 = vunpack.c.l.s4 1934713408
        %v1110 = vunpack.c.0.s8 %v1109
        %v1111 = vperm.slane %v1107, %v1110
        %v1112 = vrot.slane %v1111, 4
        %v1113 = vsel %vm1034, 0, %v1112
        %v1116 = vpack.i.b16 %v1111, %v1092
        %v1117 = vshrl.u32 %v1092, 16
        %v1118 = vshrl.u32 %v1111, 16
        %v1119 = vpack.i.b16 %v1118, %v1117
        %v1122 = vpack.i.b16 %v1113, %v1094
        %v1123 = vshrl.u32 %v1094, 16
        %v1124 = vshrl.u32 %v1113, 16
        %v1125 = vpack.i.b16 %v1124, %v1123
        %v1126 = vld [vmem:[#allocation2] sm:$0xf]
        %v1127 = vld [vmem:[#allocation2 + $0x4] sm:$0xf]
        %v1128 = vld [vmem:[#allocation2 + $0x8] sm:$0xf]
        %v1129 = vld [vmem:[#allocation2 + $0xc] sm:$0xf]
        %vm1130 = vcmask 64512
        %v1132 = vsel %vm1130, %v1116, 0
        %v1135 = vsel %vm1130, %v1126, 0
        %1137 = vmatpush.bf16.xpose.msra.mxu0 0
        %1138 = vmatpush.bf16.xpose.msra.mxu0 0
        %1139 = vmatpush.bf16.xpose.msra.mxu0 0
        %1140 = vmatpush.bf16.xpose.msra.mxu0 0
        %1141 = vmatpush.bf16.xpose.msra.mxu0 0
        %1142 = vmatpush.bf16.xpose.msra.mxu0 0
        %1143 = vmatpush.bf16.xpose.msra.mxu0 0
        %1144 = vmatpush.bf16.xpose.msra.mxu0 %v1135
        %1145 = vmatmul.bf16.gmra.mxu0 %v1132
        %v1146 = vpop.f32.mrf.mxu0
        %v1147 = vadd.f32 0.0, %v1146
        %v1148 = vpop.f32.mrf.mxu0
        %1149 = vdwg.mxu0
        %v1151 = vsel %vm1130, %v1119, 0
        %v1154 = vsel %vm1130, %v1127, 0
        %1156 = vmatpush.bf16.xpose.msra.mxu0 0
        %1157 = vmatpush.bf16.xpose.msra.mxu0 0
        %1158 = vmatpush.bf16.xpose.msra.mxu0 0
        %1159 = vmatpush.bf16.xpose.msra.mxu0 0
        %1160 = vmatpush.bf16.xpose.msra.mxu0 0
        %1161 = vmatpush.bf16.xpose.msra.mxu0 0
        %1162 = vmatpush.bf16.xpose.msra.mxu0 0
        %1163 = vmatpush.bf16.xpose.msra.mxu0 %v1154
        %1164 = vmatmul.bf16.gmra.mxu0 %v1151
        %v1165 = vpop.f32.mrf.mxu0
        %v1166 = vadd.f32 0.0, %v1165
        %v1167 = vpop.f32.mrf.mxu0
        %1168 = vdwg.mxu0
        %v1170 = vsel %vm1130, %v1122, 0
        %v1173 = vsel %vm1130, %v1128, 0
        %1175 = vmatpush.bf16.xpose.msra.mxu0 0
        %1176 = vmatpush.bf16.xpose.msra.mxu0 0
        %1177 = vmatpush.bf16.xpose.msra.mxu0 0
        %1178 = vmatpush.bf16.xpose.msra.mxu0 0
        %1179 = vmatpush.bf16.xpose.msra.mxu0 0
        %1180 = vmatpush.bf16.xpose.msra.mxu0 0
        %1181 = vmatpush.bf16.xpose.msra.mxu0 0
        %1182 = vmatpush.bf16.xpose.msra.mxu0 %v1173
        %1183 = vmatmul.bf16.gmra.mxu0 %v1170
        %v1184 = vpop.f32.mrf.mxu0
        %v1185 = vadd.f32 0.0, %v1184
        %v1186 = vpop.f32.mrf.mxu0
        %1187 = vdwg.mxu0
        %v1189 = vsel %vm1130, %v1125, 0
        %v1192 = vsel %vm1130, %v1129, 0
        %1194 = vmatpush.bf16.xpose.msra.mxu0 0
        %1195 = vmatpush.bf16.xpose.msra.mxu0 0
        %1196 = vmatpush.bf16.xpose.msra.mxu0 0
        %1197 = vmatpush.bf16.xpose.msra.mxu0 0
        %1198 = vmatpush.bf16.xpose.msra.mxu0 0
        %1199 = vmatpush.bf16.xpose.msra.mxu0 0
        %1200 = vmatpush.bf16.xpose.msra.mxu0 0
        %1201 = vmatpush.bf16.xpose.msra.mxu0 %v1192
        %1202 = vmatmul.bf16.gmra.mxu0 %v1189
        %v1203 = vpop.f32.mrf.mxu0
        %v1204 = vadd.f32 0.0, %v1203
        %v1205 = vpop.f32.mrf.mxu0
        %1206 = vdwg.mxu0
        %s1207 = sld [smem:[#allocation5 + %s48]]
        %v1208 = vlaneseq
        %v1209 = vand.u32 %v1208, 127
        %v1210 = vstv %s1207
        %vm1211 = vcmp.lt.s32.totalorder %v1209, %v1210
        %v1212 = vsel %vm1211, 1, 0
        %vm1213 = vcmp.eq.s32.totalorder %v1212, 1
        %v1214 = vsel %vm1213, %v1147, -1000000.0
        %v1215 = vsel %vm1213, %v1166, -1000000.0
        %v1216 = vsel %vm1213, %v1185, -1000000.0
        %v1217 = vsel %vm1213, %v1204, -1000000.0
        %v1218 = vsel %vm1130, %v1214, -inf
        %1219 = vmax.xlane.f32.xlu0 %v1218
        %v1220 = vpop.xlane.xlu0 %1219
        %v1221 = vsel %vm1130, %v1215, -inf
        %1222 = vmax.xlane.f32.xlu0 %v1221
        %v1223 = vpop.xlane.xlu0 %1222
        %v1224 = vsel %vm1130, %v1216, -inf
        %1225 = vmax.xlane.f32.xlu0 %v1224
        %v1226 = vpop.xlane.xlu0 %1225
        %v1227 = vsel %vm1130, %v1217, -inf
        %1228 = vmax.xlane.f32.xlu0 %v1227
        %v1229 = vpop.xlane.xlu0 %1228
        %v1230 = vsub.f32 %v1214, %v1220
        %v1231 = vsub.f32 %v1215, %v1223
        %v1232 = vsub.f32 %v1216, %v1226
        %v1233 = vsub.f32 %v1217, %v1229
        %v1234 = vmul.f32 %v1230, 1.442695
        %v1235 = vpow.pop %v1234
        %v1236 = vmul.f32 %v1231, 1.442695
        %v1237 = vpow.pop %v1236
        %v1238 = vmul.f32 %v1232, 1.442695
        %v1239 = vpow.pop %v1238
        %v1240 = vmul.f32 %v1233, 1.442695
        %v1241 = vpow.pop %v1240
        %v1242 = vsel %vm1130, %v1235, 0.0
        %1243 = vadd.xlane.f32.xlu0 %v1242
        %v1244 = vpop.xlane.xlu0 %1243
        %v1245 = vsel %vm1130, %v1237, 0.0
        %1246 = vadd.xlane.f32.xlu0 %v1245
        %v1247 = vpop.xlane.xlu0 %1246
        %v1248 = vsel %vm1130, %v1239, 0.0
        %1249 = vadd.xlane.f32.xlu0 %v1248
        %v1250 = vpop.xlane.xlu0 %1249
        %v1251 = vsel %vm1130, %v1241, 0.0
        %1252 = vadd.xlane.f32.xlu0 %v1251
        %v1253 = vpop.xlane.xlu0 %1252
        %v1254 = vrcp.pop %v1244
        %v1255 = vrcp.pop %v1247
        %v1256 = vrcp.pop %v1250
        %v1257 = vrcp.pop %v1253
        %v1258 = vmul.f32 %v1235, %v1254
        %v1259 = vmul.f32 %v1237, %v1255
        %v1260 = vmul.f32 %v1239, %v1256
        %v1261 = vmul.f32 %v1241, %v1257
        %v1262 = vpack.c.bf16 %v1258, %v1258
        %v1263 = vpack.c.bf16 %v1259, %v1259
        %v1264 = vpack.c.bf16 %v1260, %v1260
        %v1265 = vpack.c.bf16 %v1261, %v1261
        %v1266 = vld [vmem:[#allocation3] sm:$0xf]
        %v1267 = vld [vmem:[#allocation3 + $0x4] sm:$0xf]
        %v1268 = vld [vmem:[#allocation3 + $0x8] sm:$0xf]
        %v1269 = vld [vmem:[#allocation3 + $0xc] sm:$0xf]
        %v1271 = vsel %vm1130, %v1262, 0
        %vm1273 = vcmask 1043456
        %v1275 = vsel %vm1273, %v1266, 0
        %1277 = vmatpush.bf16.msra.mxu0 0
        %1278 = vmatpush.bf16.msra.mxu0 0
        %1279 = vmatpush.bf16.msra.mxu0 0
        %1280 = vmatpush.bf16.msra.mxu0 0
        %1281 = vmatpush.bf16.msra.mxu0 0
        %1282 = vmatpush.bf16.msra.mxu0 0
        %1283 = vmatpush.bf16.msra.mxu0 0
        %1284 = vmatpush.bf16.msra.mxu0 %v1275
        %1285 = vmatmul.bf16.gmra.mxu0 %v1271
        %v1286 = vpop.f32.mrf.mxu0
        %v1287 = vadd.f32 0.0, %v1286
        %v1288 = vpop.f32.mrf.mxu0
        %1289 = vdwg.mxu0
        %v1291 = vsel %vm1130, %v1263, 0
        %v1294 = vsel %vm1273, %v1267, 0
        %1296 = vmatpush.bf16.msra.mxu0 0
        %1297 = vmatpush.bf16.msra.mxu0 0
        %1298 = vmatpush.bf16.msra.mxu0 0
        %1299 = vmatpush.bf16.msra.mxu0 0
        %1300 = vmatpush.bf16.msra.mxu0 0
        %1301 = vmatpush.bf16.msra.mxu0 0
        %1302 = vmatpush.bf16.msra.mxu0 0
        %1303 = vmatpush.bf16.msra.mxu0 %v1294
        %1304 = vmatmul.bf16.gmra.mxu0 %v1291
        %v1305 = vpop.f32.mrf.mxu0
        %v1306 = vadd.f32 0.0, %v1305
        %v1307 = vpop.f32.mrf.mxu0
        %1308 = vdwg.mxu0
        %v1310 = vsel %vm1130, %v1264, 0
        %v1313 = vsel %vm1273, %v1268, 0
        %1315 = vmatpush.bf16.msra.mxu0 0
        %1316 = vmatpush.bf16.msra.mxu0 0
        %1317 = vmatpush.bf16.msra.mxu0 0
        %1318 = vmatpush.bf16.msra.mxu0 0
        %1319 = vmatpush.bf16.msra.mxu0 0
        %1320 = vmatpush.bf16.msra.mxu0 0
        %1321 = vmatpush.bf16.msra.mxu0 0
        %1322 = vmatpush.bf16.msra.mxu0 %v1313
        %1323 = vmatmul.bf16.gmra.mxu0 %v1310
        %v1324 = vpop.f32.mrf.mxu0
        %v1325 = vadd.f32 0.0, %v1324
        %v1326 = vpop.f32.mrf.mxu0
        %1327 = vdwg.mxu0
        %v1329 = vsel %vm1130, %v1265, 0
        %v1332 = vsel %vm1273, %v1269, 0
        %1334 = vmatpush.bf16.msra.mxu0 0
        %1335 = vmatpush.bf16.msra.mxu0 0
        %1336 = vmatpush.bf16.msra.mxu0 0
        %1337 = vmatpush.bf16.msra.mxu0 0
        %1338 = vmatpush.bf16.msra.mxu0 0
        %1339 = vmatpush.bf16.msra.mxu0 0
        %1340 = vmatpush.bf16.msra.mxu0 0
        %1341 = vmatpush.bf16.msra.mxu0 %v1332
        %1342 = vmatmul.bf16.gmra.mxu0 %v1329
        %v1343 = vpop.f32.mrf.mxu0
        %v1344 = vadd.f32 0.0, %v1343
        %v1345 = vpop.f32.mrf.mxu0
        %1346 = vdwg.mxu0
        %v1347 = vpack.c.bf16 %v1287, %v1287
        %v1348 = vpack.c.bf16 %v1306, %v1306
        %v1349 = vpack.c.bf16 %v1325, %v1325
        %v1350 = vpack.c.bf16 %v1344, %v1344
        %v1353 = vpack.i.b16 %v1348, %v1347
        %v1354 = vshrl.u32 %v1347, 16
        %v1355 = vshrl.u32 %v1348, 16
        %v1356 = vpack.i.b16 %v1355, %v1354
        %v1359 = vpack.i.b16 %v1350, %v1349
        %v1360 = vshrl.u32 %v1349, 16
        %v1361 = vshrl.u32 %v1350, 16
        %v1362 = vpack.i.b16 %v1361, %v1360
        %v1365 = vunpack.c.l.s4 1983009808
        %v1366 = vunpack.c.0.s8 %v1365
        %v1367 = vperm.slane %v1353, %v1366
        %v1370 = vunpack.c.l.s4 1983009808
        %v1371 = vunpack.c.0.s8 %v1370
        %v1372 = vperm.slane %v1359, %v1371
        %v1373 = vrot.slane %v1372, 4
        %v1374 = vsel %vm1034, %v1373, %v1367
        %v1375 = vrot.slane %v1367, 4
        %v1376 = vsel %vm1034, %v1372, %v1375
        %v1378 = vunpack.c.l.s4 1934713408
        %v1379 = vunpack.c.0.s8 %v1378
        %v1380 = vperm.slane %v1374, %v1379
        %v1382 = vunpack.c.l.s4 1934713408
        %v1383 = vunpack.c.0.s8 %v1382
        %v1384 = vperm.slane %v1376, %v1383
        %v1385 = vrot.slane %v1380, 4
        %v1386 = vsel %vm1034, 0, %v1385
        %v1387 = vrot.slane %v1384, 4
        %v1388 = vsel %vm1034, 0, %v1387
        %v1391 = vunpack.c.l.s4 1983009808
        %v1392 = vunpack.c.0.s8 %v1391
        %v1393 = vperm.slane %v1356, %v1392
        %v1396 = vunpack.c.l.s4 1983009808
        %v1397 = vunpack.c.0.s8 %v1396
        %v1398 = vperm.slane %v1362, %v1397
        %v1399 = vrot.slane %v1398, 4
        %v1400 = vsel %vm1034, %v1399, %v1393
        %v1401 = vrot.slane %v1393, 4
        %v1402 = vsel %vm1034, %v1398, %v1401
        %v1404 = vunpack.c.l.s4 1934713408
        %v1405 = vunpack.c.0.s8 %v1404
        %v1406 = vperm.slane %v1400, %v1405
        %v1408 = vunpack.c.l.s4 1934713408
        %v1409 = vunpack.c.0.s8 %v1408
        %v1410 = vperm.slane %v1402, %v1409
        %v1411 = vrot.slane %v1406, 4
        %v1412 = vsel %vm1034, 0, %v1411
        %v1413 = vrot.slane %v1410, 4
        %v1414 = vsel %vm1034, 0, %v1413
        %v1415 = vsel %vm1034, %v1387, %v1380
        %v1417 = vunpack.c.l.s4 1983009808
        %v1418 = vunpack.c.0.s8 %v1417
        %v1419 = vperm.slane %v1415, %v1418
        %v1420 = vrot.slane %v1388, 4
        %v1421 = vsel %vm1034, %v1420, %v1386
        %v1423 = vunpack.c.l.s4 1983009808
        %v1424 = vunpack.c.0.s8 %v1423
        %v1425 = vperm.slane %v1421, %v1424
        %v1426 = vrot.slane %v1425, 4
        %v1427 = vsel %vm1034, %v1426, %v1419
        %v1429 = vunpack.c.l.s4 1934713408
        %v1430 = vunpack.c.0.s8 %v1429
        %v1431 = vperm.slane %v1427, %v1430
        %v1432 = vrot.slane %v1431, 4
        %v1433 = vsel %vm1034, 0, %v1432
        %v1434 = vsel %vm1034, %v1413, %v1406
        %v1436 = vunpack.c.l.s4 1983009808
        %v1437 = vunpack.c.0.s8 %v1436
        %v1438 = vperm.slane %v1434, %v1437
        %v1439 = vrot.slane %v1414, 4
        %v1440 = vsel %vm1034, %v1439, %v1412
        %v1442 = vunpack.c.l.s4 1983009808
        %v1443 = vunpack.c.0.s8 %v1442
        %v1444 = vperm.slane %v1440, %v1443
        %v1445 = vrot.slane %v1444, 4
        %v1446 = vsel %vm1034, %v1445, %v1438
        %v1448 = vunpack.c.l.s4 1934713408
        %v1449 = vunpack.c.0.s8 %v1448
        %v1450 = vperm.slane %v1446, %v1449
        %v1451 = vrot.slane %v1450, 4
        %v1452 = vsel %vm1034, 0, %v1451
        %v1455 = vpack.i.b16 %v1450, %v1431
        %v1456 = vshrl.u32 %v1431, 16
        %v1457 = vshrl.u32 %v1450, 16
        %v1458 = vpack.i.b16 %v1457, %v1456
        %v1461 = vpack.i.b16 %v1452, %v1433
        %v1462 = vshrl.u32 %v1433, 16
        %v1463 = vshrl.u32 %v1452, 16
        %v1464 = vpack.i.b16 %v1463, %v1462
        %v1465 = vunpack.c.l.b16 %v1458
        %v1466 = vpack.c.b16 %v1465, %v1465
        %1467 = vrot.lane.b32.xlu0 %v1466, 8
        %v1468 = vpop.permute.xlu0 %1467
        %v1469 = vunpack.c.l.b16 %v1461
        %v1470 = vpack.c.b16 %v1469, %v1469
        %1471 = vrot.lane.b32.xlu0 %v1470, 16
        %v1472 = vpop.permute.xlu0 %1471
        %v1473 = vunpack.c.l.b16 %v1464
        %v1474 = vpack.c.b16 %v1473, %v1473
        %1475 = vrot.lane.b32.xlu0 %v1474, 24
        %v1476 = vpop.permute.xlu0 %1475
        %v1479 = vsel %vm1130, %v1455, %v1468
        %vm1480 = vcmask 130048
        %v1482 = vsel %vm1480, %v1479, %v1472
        %vm1483 = vcmask 195584
        %v1485 = vsel %vm1483, %v1482, %v1476
        %v1486 = vld [vmem:[#allocation9] sm:$0xf]
        %v1487 = vld [vmem:[#allocation9 + $0x4] sm:$0xf]
        %v1488 = vld [vmem:[#allocation9 + $0x8] sm:$0xf]
        %v1489 = vld [vmem:[#allocation9 + $0xc] sm:$0xf]
        %v1490 = vld [vmem:[%s9] sm:$0x1]
        %v1492 = vperm.slane %v1490, 0
        %v1498 = vunpack.c.l.b16 %v1486
        %v1499 = vunpack.c.l.b16 %v1487
        %v1500 = vunpack.c.l.b16 %v1488
        %v1501 = vunpack.c.l.b16 %v1489
        %v1502 = vpack.c.b16 %v1499, %v1498
        %v1503 = vpack.c.b16 %v1501, %v1500
        %v1506 = vsel %vm986, %v1485, 0
        %1508 = vmatpush.bf16.msra.mxu0 0
        %1509 = vmatpush.bf16.msra.mxu0 0
        %1510 = vmatpush.bf16.msra.mxu0 0
        %1511 = vmatpush.bf16.msra.mxu0 0
        %1512 = vmatpush.bf16.msra.mxu0 0
        %1513 = vmatpush.bf16.msra.mxu0 0
        %1514 = vmatpush.bf16.msra.mxu0 %v1503
        %1515 = vmatpush.bf16.msra.mxu0 %v1502
        %1516 = vmatmul.bf16.gmra.mxu0 %v1506
        %v1517 = vpop.f32.mrf.mxu0
        %v1518 = vadd.f32 %v1492, %v1517
        %v1519 = vpop.f32.mrf.mxu0
        %1520 = vdwg.mxu0
        %v1521 = vunpack.c.l.bf16 %v965
        %v1522 = vadd.f32 %v1521, %v1518
        %v1523 = vsel %vm986, %v1522, 0.0
        %1524 = vadd.xlane.f32.xlu0 %v1523
        %v1525 = vpop.xlane.xlu0 %1524
        %v1526 = vrcp.pop 32.0
        %v1527 = vmul.f32 32.0, %v1526
        %v1528 = vsub.f32 1.0, %v1527
        %v1529 = vmul.f32 %v1526, %v1528
        %v1530 = vadd.f32 %v1526, %v1529
        %vm1531 = vweird.f32 %v1526
        %v1532 = vsel %vm1531, %v1526, %v1530
        %v1533 = vmul.f32 %v1525, %v1532
        %v1534 = vsub.f32 %v1522, %v1533
        %v1535 = vmul.f32 %v1534, %v1534
        %v1536 = vsel %vm986, %v1535, 0.0
        %1537 = vadd.xlane.f32.xlu0 %v1536
        %v1538 = vpop.xlane.xlu0 %1537
        %v1539 = vmul.f32 %v1538, %v1532
        %v1540 = vadd.f32 %v1539, 1e-05
        %v1541 = vrsqrt.pop %v1540
        %v1542 = vmul.f32 %v1541, %v1540
        %v1543 = vmul.f32 %v1542, %v1541
        %v1544 = vmul.f32 0.5, %v1543
        %v1545 = vsub.f32 1.5, %v1544
        %v1546 = vmul.f32 %v1541, %v1545
        %vm1547 = vweird.f32 %v1540
        %vm1548 = vweird.f32 %v1541
        %vm1549 = vmor %vm1547, %vm1548
        %v1550 = vsel %vm1549, %v1541, %v1546
        %v1551 = vmul.f32 %v1534, %v1550
        %v1552 = vld [vmem:[%s10] sm:$0x1]
        %v1554 = vperm.slane %v1552, 0
        %v1556 = vmul.f32 %v1551, %v1554
        %v1557 = vld [vmem:[%s11] sm:$0x1]
        %v1559 = vperm.slane %v1557, 0
        %v1561 = vadd.f32 %v1556, %v1559
        %v1562 = vpack.c.bf16 %v1561, %v1561
        %v1563 = vld [vmem:[#allocation11] sm:$0xf]
        %v1564 = vld [vmem:[#allocation11 + $0x4] sm:$0xf]
        %v1565 = vld [vmem:[#allocation11 + $0x8] sm:$0xf]
        %v1566 = vld [vmem:[#allocation11 + $0xc] sm:$0xf]
        %v1567 = vld [vmem:[%s13] sm:$0x1]
        %v1569 = vperm.slane %v1567, 0
        %v1575 = vunpack.c.l.b16 %v1563
        %v1576 = vunpack.c.l.b16 %v1564
        %v1577 = vunpack.c.l.b16 %v1565
        %v1578 = vunpack.c.l.b16 %v1566
        %v1579 = vpack.c.b16 %v1576, %v1575
        %v1580 = vpack.c.b16 %v1578, %v1577
        %v1584 = vsel %vm986, %v1562, 0
        %1586 = vmatpush.bf16.msra.mxu0 0
        %1587 = vmatpush.bf16.msra.mxu0 0
        %1588 = vmatpush.bf16.msra.mxu0 0
        %1589 = vmatpush.bf16.msra.mxu0 0
        %1590 = vmatpush.bf16.msra.mxu0 0
        %1591 = vmatpush.bf16.msra.mxu0 0
        %1592 = vmatpush.bf16.msra.mxu0 %v1580
        %1593 = vmatpush.bf16.msra.mxu0 %v1579
        %1594 = vmatmul.bf16.gmra.mxu0 %v1584
        %v1595 = vpop.f32.mrf.mxu0
        %v1596 = vadd.f32 %v1569, %v1595
        %v1597 = vpop.f32.mrf.mxu0
        %1598 = vdwg.mxu0
        %v1599 = vmax.f32 %v1596, 0.0
        %v1600 = vpack.c.bf16 %v1599, %v1599
        %v1601 = vld [vmem:[%s14] sm:$0xf]
        %v1602 = vld [vmem:[%s14 + $0x4] sm:$0xf]
        %v1603 = vld [vmem:[%s14 + $0x8] sm:$0xf]
        %v1604 = vld [vmem:[%s14 + $0xc] sm:$0xf]
        %v1605 = vld [vmem:[%s14 + $0x10] sm:$0xf]
        %v1606 = vld [vmem:[%s14 + $0x14] sm:$0xf]
        %v1607 = vld [vmem:[%s14 + $0x18] sm:$0xf]
        %v1608 = vld [vmem:[%s14 + $0x1c] sm:$0xf]
        %v1609 = vld [vmem:[%s15] sm:$0x1]
        %v1611 = vperm.slane %v1609, 0
        %v1621 = vunpack.c.l.b16 %v1601
        %v1622 = vunpack.c.l.b16 %v1602
        %v1623 = vunpack.c.l.b16 %v1603
        %v1624 = vunpack.c.l.b16 %v1604
        %v1625 = vunpack.c.l.b16 %v1605
        %v1626 = vunpack.c.l.b16 %v1606
        %v1627 = vunpack.c.l.b16 %v1607
        %v1628 = vunpack.c.l.b16 %v1608
        %v1629 = vpack.c.b16 %v1622, %v1621
        %v1630 = vpack.c.b16 %v1624, %v1623
        %v1631 = vpack.c.b16 %v1626, %v1625
        %v1632 = vpack.c.b16 %v1628, %v1627
        %vm1637 = vcmask 523264
        %v1639 = vsel %vm1637, %v1600, 0
        %1641 = vmatpush.bf16.msra.mxu0 0
        %1642 = vmatpush.bf16.msra.mxu0 0
        %1643 = vmatpush.bf16.msra.mxu0 0
        %1644 = vmatpush.bf16.msra.mxu0 0
        %1645 = vmatpush.bf16.msra.mxu0 %v1632
        %1646 = vmatpush.bf16.msra.mxu0 %v1631
        %1647 = vmatpush.bf16.msra.mxu0 %v1630
        %1648 = vmatpush.bf16.msra.mxu0 %v1629
        %1649 = vmatmul.bf16.gmra.mxu0 %v1639
        %v1650 = vpop.f32.mrf.mxu0
        %v1651 = vadd.f32 %v1611, %v1650
        %v1652 = vpop.f32.mrf.mxu0
        %1653 = vdwg.mxu0
        %v1654 = vadd.f32 %v1561, %v1651
        %v1655 = vsel %vm986, %v1654, 0.0
        %1656 = vadd.xlane.f32.xlu0 %v1655
        %v1657 = vpop.xlane.xlu0 %1656
        %v1658 = vmul.f32 %v1657, %v1532
        %v1659 = vsub.f32 %v1654, %v1658
        %v1660 = vmul.f32 %v1659, %v1659
        %v1661 = vsel %vm986, %v1660, 0.0
        %1662 = vadd.xlane.f32.xlu0 %v1661
        %v1663 = vpop.xlane.xlu0 %1662
        %v1664 = vmul.f32 %v1663, %v1532
        %v1665 = vadd.f32 %v1664, 1e-05
        %v1666 = vrsqrt.pop %v1665
        %v1667 = vmul.f32 %v1666, %v1665
        %v1668 = vmul.f32 %v1667, %v1666
        %v1669 = vmul.f32 0.5, %v1668
        %v1670 = vsub.f32 1.5, %v1669
        %v1671 = vmul.f32 %v1666, %v1670
        %vm1672 = vweird.f32 %v1665
        %vm1673 = vweird.f32 %v1666
        %vm1674 = vmor %vm1672, %vm1673
        %v1675 = vsel %vm1674, %v1666, %v1671
        %v1676 = vmul.f32 %v1659, %v1675
        %v1677 = vld [vmem:[%s16] sm:$0x1]
        %v1679 = vperm.slane %v1677, 0
        %v1681 = vmul.f32 %v1676, %v1679
        %v1682 = vld [vmem:[%s17] sm:$0x1]
        %v1684 = vperm.slane %v1682, 0
        %v1686 = vadd.f32 %v1681, %v1684
        %v1687 = vpack.c.bf16 %v1686, %v1686
        %vm1688 = vcmask 257024
        %1689 = vst.msk [vmem:[%s621] sm:$0xf] %vm1688, %v1687
        %s1690 = sand.u32 %s428, 1
        %s1691 = scalar_lea.sflag [#allocation8], %s1690
        %s1692 = sand.u32 %s428, 1
        %s1693 = smul.addr %s1692, 4
        %s1694 = scalar_lea.vmem [#allocation12], %s1693
        // Predicated region
        $region105: #{tpu_custom_call.1} parent=87 // pred_check
          %p1695 = pneg %p438
        $region106: #{tpu_custom_call.1} parent=87 // pred_check_branch
          %1697 = sbr.rel (%p1695) target = $region108
        $region107: #{tpu_custom_call.1} parent=87 // pred_region
          %1699 = vsyncadd %s1691, 0
          %s1700 = sadd.s32 %s49, %s48
          %s1701 = smul.addr %s1700, 4
          %s1702 = scalar_lea.hbm %s18, %s1701
          %s1704 = sshll.u32 %s1694, 4
          %s1705 = int_to_ptr.vmem [resolvable:$true] %s1704
          %s1706 = sshll.u32 %s1702, 4
          %s1707 = int_to_ptr.hbm [resolvable:$true] %s1706
          %1709 = dma.vmem_to_hbm [thread:$0]  %s1705, 64, %s1707, %s1691
        $region108: #{tpu_custom_call.1} parent=87 // pred_fallthru
          _
      $region88: #{tpu_custom_call.1} parent=5 // pred_fallthru
        _
      %p1710 = scmp.le.s32.totalorder 2, %s39
      // Predicated region
      $region109: #{tpu_custom_call.1} parent=5 // pred_check
        %p1711 = pneg %p1710
      $region110: #{tpu_custom_call.1} parent=5 // pred_check_branch
        %1713 = sbr.rel (%p1711) target = $region112
      $region111: #{tpu_custom_call.1} parent=5 // pred_region
        %s1714 = ssub.s32 %s39, 2
        // Predicated region
        $region113: #{tpu_custom_call.1} parent=111 // pred_check
          %p1715 = pneg %p444
        $region114: #{tpu_custom_call.1} parent=111 // pred_check_branch
          %1717 = sbr.rel (%p1715) target = $region116
        $region115: #{tpu_custom_call.1} parent=111 // pred_region
          %s1718 = sand.u32 %s429, 1
          %s1719 = scalar_lea.sflag [#allocation8], %s1718
          %s1720 = sand.u32 %s429, 1
          %s1721 = smul.addr %s1720, 4
          %s1722 = scalar_lea.vmem [#allocation12], %s1721
          %1724 = dma.done %s1719, 64
        $region116: #{tpu_custom_call.1} parent=111 // pred_fallthru
          _
      $region112: #{tpu_custom_call.1} parent=5 // pred_fallthru
        _
    $region6: #{tpu_custom_call.1} parent=1 // loop_footer
      %s43 = sadd.s32 1, %s39
    $region7: #{tpu_custom_call.1} parent=1 // loop_footer_branch
      %38 = sbr.rel target = $region3
    $region8: #{tpu_custom_call.1} parent=1 // loop_exit
      _
    %1725 = vsyncpa [#allocation7], 1
    %s1726 = scalar_lea.sflag [#allocation7], 1
    %1727 = vsyncpa %s1726, 1
    %1728 = vsyncpa [#allocation10], 1
    %1729 = vsyncpa [#allocation8], 1
    %s1730 = scalar_lea.sflag [#allocation8], 1
    %1731 = vsyncpa %s1730, 1

</llo_original>
